<compile_context>
chip_gen: v5e
topology: v5e:2x2
jax: 0.10.0
libtpu: 0.0.40
codegen_flags: <defaults>
</compile_context>

<pallas_src>
import math
import functools

import jax
import jax.numpy as jnp
from jax.experimental import pallas as pl
from jax.experimental.pallas import tpu as pltpu

C1 = 128     # channels after first conv
C2 = 256     # channels after second conv
BN_EPS = 1e-5
_LANE = 128  # TPU lane width


def _gelu_exact(v):
    # PyTorch nn.GELU() default == exact erf-based GELU.
    # (tanh-approx GELU would offload more to the EUP but changes numerics.)
    return 0.5 * v * (1.0 + jax.lax.erf(v * jnp.float32(1.0 / math.sqrt(2.0))))


def _temporal_cnn_kernel(xpad_ref, w1_ref, shift_ref, w2_ref, b2_ref, out_ref,
                         *, bt, L, cpad):
    """One grid step = a block of `bt` batch elements.

    xpad_ref : (bt, L+2, cpad)  channels-last input, seq zero-padded (pad=1),
                                channels zero-padded to a multiple of 128
    w1_ref   : (3*cpad, 128)    conv1 taps stacked on K, BN scale folded in
    shift_ref: (1, 128)         conv1 bias + BN shift, folded
    w2_ref   : (128, 256)       1x1 conv weight
    b2_ref   : (1, 256)
    out_ref  : (bt*L//4, 256)   flattened (batch-major) pooled output rows
    """
    rows = bt * L

    # im2col: output position t needs padded rows t, t+1, t+2 (== x[t-1,t,t+1]).
    # cpad % 128 == 0, so the lane-dim concat is tile-aligned.  L % 8 == 0, so
    # collapsing (bt, L) -> bt*L is a sublane-aligned (free) reshape.
    taps = [xpad_ref[:, k:k + L, :].reshape(rows, cpad) for k in range(3)]
    xcat = jnp.concatenate(taps, axis=-1)                       # (bt*L, 3*cpad)

    # Conv1d(k=3,pad=1) + BatchNorm(eval): one fused MXU matmul + shift.
    y = jnp.dot(xcat, w1_ref[...], preferred_element_type=jnp.float32)
    y = _gelu_exact(y + shift_ref[...])
    # TODO(synk): Dropout omitted (inference / identity).

    # MaxPool1d(4): L % 4 == 0, so groups of 4 rows never cross batch elements.
    y = jnp.max(y.reshape(rows // 4, 4, C1), axis=1)            # (bt*L//4, 128)

    # Conv1d(128 -> 256, k=1) == matmul over the flattened pooled rows.
    z = jnp.dot(y, w2_ref[...], preferred_element_type=jnp.float32) + b2_ref[...]
    out_ref[...] = _gelu_exact(z).astype(out_ref.dtype)


def _pick_block_batch(N, Lout, target_rows=2048):
    """Pick bt: bt*L ~ target rows, >=2 grid steps when N>=2 (v7x has 2 TCs),
    and (bt*Lout) % 8 == 0 so the output block stays sublane-aligned."""
    cap = max(1, min(N, target_rows // max(4 * Lout, 1)))
    if N >= 2:
        cap = min(cap, N // 2)
    for bt in range(max(cap, 1), 0, -1):
        if N % bt == 0 and (bt * Lout) % 8 == 0:
            return bt
    return N   # single block: block shape == full array, always legal


def simplified_temporal_cnn_pallas(x_ncl, params, *, block_batch=None):
    """x_ncl: (N, Cin, L) float32, PyTorch NCL layout. Returns (N, 256, L//4)."""
    N, Cin, L = x_ncl.shape
    assert L % 8 == 0, "need L % 8 == 0 (exact MaxPool(4) + aligned reshapes)"
    Lout = L // 4
    cpad = max(_LANE, -(-Cin // _LANE) * _LANE)          # channels -> 128-multiple
    bt = block_batch or _pick_block_batch(N, Lout)
    assert N % bt == 0 and (bt == N or (bt * Lout) % 8 == 0)

    # --- layout + parameter folding (cheap one-off glue, plain JAX) ----------
    x_cl = jnp.transpose(x_ncl, (0, 2, 1))                        # (N, L, Cin)
    # Single pad provides both the conv pad=1 rows and the channel alignment;
    # XLA fuses it with the transpose copy (no extra HBM round trip of x).
    x_pad = jnp.pad(x_cl, ((0, 0), (1, 1), (0, cpad - Cin)))      # (N, L+2, cpad)

    inv_std = 1.0 / jnp.sqrt(params["bn_var"] + BN_EPS)
    scale = (params["bn_gamma"] * inv_std).astype(jnp.float32)           # (128,)
    shift = ((params["b1"] - params["bn_mean"]) * scale
             + params["bn_beta"]).reshape(1, C1).astype(jnp.float32)

    # conv1 weight: PyTorch (Cout=128, Cin, K=3) -> (K, cpad, Cout) -> (3*cpad, 128)
    # with the BN scale folded into the output columns.
    w1 = jnp.transpose(params["w1"], (2, 1, 0))                   # (3, Cin, 128)
    w1 = jnp.pad(w1, ((0, 0), (0, cpad - Cin), (0, 0)))           # (3, cpad, 128)
    w1 = (w1 * scale[None, None, :]).reshape(3 * cpad, C1).astype(jnp.float32)

    # conv2 weight: PyTorch (256, 128, 1) -> (128, 256)
    w2 = jnp.transpose(params["w2"][:, :, 0], (1, 0)).astype(jnp.float32)
    b2 = params["b2"].reshape(1, C2).astype(jnp.float32)

    kernel = functools.partial(_temporal_cnn_kernel, bt=bt, L=L, cpad=cpad)

    out_flat = pl.pallas_call(
        kernel,
        out_shape=jax.ShapeDtypeStruct((N * Lout, C2), jnp.float32),
        grid_spec=pltpu.PrefetchScalarGridSpec(
            num_scalar_prefetch=0,
            grid=(N // bt,),
            in_specs=[
                pl.BlockSpec((bt, L + 2, cpad), lambda n: (n, 0, 0)),
                pl.BlockSpec((3 * cpad, C1), lambda n: (0, 0)),
                pl.BlockSpec((1, C1), lambda n: (0, 0)),
                pl.BlockSpec((C1, C2), lambda n: (0, 0)),
                pl.BlockSpec((1, C2), lambda n: (0, 0)),
            ],
            out_specs=pl.BlockSpec((bt * Lout, C2), lambda n: (n, 0)),
        ),
        compiler_params=pltpu.CompilerParams(
            dimension_semantics=("parallel",)),
    )(x_pad, w1, shift, w2, b2)

    # (N*Lout, 256) -> (N, 256, Lout): reshape is metadata-only, transpose is
    # one small copy back to PyTorch's NCL layout.
    return jnp.transpose(out_flat.reshape(N, Lout, C2), (0, 2, 1))


def reference_forward(x_ncl, params):
    """Pure-JAX reference mirroring the PyTorch forward (eval mode)."""
    dn = ("NCH", "OIH", "NCH")
    y = jax.lax.conv_general_dilated(
        x_ncl, params["w1"], window_strides=(1,), padding=((1, 1),),
        dimension_numbers=dn) + params["b1"][None, :, None]
    inv_std = 1.0 / jnp.sqrt(params["bn_var"] + BN_EPS)
    y = (y - params["bn_mean"][None, :, None]) * inv_std[None, :, None]
    y = y * params["bn_gamma"][None, :, None] + params["bn_beta"][None, :, None]
    y = jax.nn.gelu(y, approximate=False)
    N, C, L = y.shape
    y = y.reshape(N, C, L // 4, 4).max(axis=-1)
    z = jax.lax.conv_general_dilated(
        y, params["w2"], window_strides=(1,), padding=((0, 0),),
        dimension_numbers=dn) + params["b2"][None, :, None]
    return jax.nn.gelu(z, approximate=False)


def init_params(key, input_dim):
    """Deterministic params matching the PyTorch module's shapes; BN uses
    non-trivial 'trained' running stats so the scale/shift folding is exercised."""
    k1, k2, k3, k4, k5, k6, k7, k8 = jax.random.split(key, 8)
    bound1 = 1.0 / math.sqrt(input_dim * 3)
    bound2 = 1.0 / math.sqrt(C1 * 1)
    return {
        "w1": jax.random.uniform(k1, (C1, input_dim, 3), jnp.float32,
                                 -bound1, bound1),
        "b1": jax.random.uniform(k2, (C1,), jnp.float32, -bound1, bound1),
        "bn_gamma": 1.0 + 0.1 * jax.random.normal(k5, (C1,), jnp.float32),
        "bn_beta": 0.1 * jax.random.normal(k6, (C1,), jnp.float32),
        "bn_mean": 0.1 * jax.random.normal(k7, (C1,), jnp.float32),
        "bn_var": jax.random.uniform(k8, (C1,), jnp.float32, 0.5, 1.5),
        "w2": jax.random.uniform(k3, (C2, C1, 1), jnp.float32,
                                 -bound2, bound2),
        "b2": jax.random.uniform(k4, (C2,), jnp.float32, -bound2, bound2),
    }


if __name__ == "__main__":
    # Small shapes consistent with the module: (batch, input_dim, seq_len).
    N, Cin, L = 8, 64, 32

    key = jax.random.PRNGKey(0)
    kx, kp = jax.random.split(key)
    x = jax.random.normal(kx, (N, Cin, L), dtype=jnp.float32)
    params = init_params(kp, Cin)

    out = jax.block_until_ready(simplified_temporal_cnn_pallas(x, params))
    ref = jax.block_until_ready(reference_forward(x, params))

    assert out.shape == (N, C2, L // 4), out.shape
    max_err = float(jnp.max(jnp.abs(out - ref)))
    assert jnp.allclose(out, ref, atol=1e-4, rtol=1e-4), max_err

    print("KERNEL_OK")
</pallas_src>

<mosaic_0001>
module attributes {stable_mosaic.version = 11 : i64} {
  func.func @_temporal_cnn_kernel(%arg0: i32, %arg1: memref<4x34x128xf32, #tpu.memory_space<vmem>>, %arg2: memref<384x128xf32, #tpu.memory_space<vmem>>, %arg3: memref<1x128xf32, #tpu.memory_space<vmem>>, %arg4: memref<128x256xf32, #tpu.memory_space<vmem>>, %arg5: memref<1x256xf32, #tpu.memory_space<vmem>>, %arg6: memref<32x256xf32, #tpu.memory_space<vmem>>) attributes {dimension_semantics = [#tpu.dimension_semantics<parallel>], iteration_bounds = array<i64: 2>, scalar_prefetch = 0 : i64, scratch_operands = 0 : i64, tpu.core_type = #tpu.core_type<tc>, window_params = [{transform_indices = @transform_0, window_bounds = array<i64: 4, 34, 128>}, {pipeline_mode = #tpu.pipeline_mode<synchronous>, transform_indices = @transform_1, window_bounds = array<i64: 384, 128>}, {pipeline_mode = #tpu.pipeline_mode<synchronous>, transform_indices = @transform_2, window_bounds = array<i64: 1, 128>}, {pipeline_mode = #tpu.pipeline_mode<synchronous>, transform_indices = @transform_3, window_bounds = array<i64: 128, 256>}, {pipeline_mode = #tpu.pipeline_mode<synchronous>, transform_indices = @transform_4, window_bounds = array<i64: 1, 256>}, {transform_indices = @transform_5, window_bounds = array<i64: 32, 256>}]} {
    %c0 = arith.constant 0 : index
    %c0_0 = arith.constant 0 : index
    %c0_1 = arith.constant 0 : index
    %0 = vector.load %arg1[%c0, %c0_0, %c0_1] : memref<4x34x128xf32, #tpu.memory_space<vmem>>, vector<4x32x128xf32>
    %1 = vector.shape_cast %0 : vector<4x32x128xf32> to vector<128x128xf32>
    %c0_2 = arith.constant 0 : index
    %c1 = arith.constant 1 : index
    %c0_3 = arith.constant 0 : index
    %2 = vector.load %arg1[%c0_2, %c1, %c0_3] : memref<4x34x128xf32, #tpu.memory_space<vmem>>, vector<4x32x128xf32>
    %3 = vector.shape_cast %2 : vector<4x32x128xf32> to vector<128x128xf32>
    %c0_4 = arith.constant 0 : index
    %c2 = arith.constant 2 : index
    %c0_5 = arith.constant 0 : index
    %4 = vector.load %arg1[%c0_4, %c2, %c0_5] : memref<4x34x128xf32, #tpu.memory_space<vmem>>, vector<4x32x128xf32>
    %5 = vector.shape_cast %4 : vector<4x32x128xf32> to vector<128x128xf32>
    %6 = tpu.concatenate %1, %3, %5 in 1 : vector<128x128xf32>, vector<128x128xf32>, vector<128x128xf32> -> vector<128x384xf32>
    %c0_6 = arith.constant 0 : index
    %c0_7 = arith.constant 0 : index
    %7 = vector.load %arg2[%c0_6, %c0_7] : memref<384x128xf32, #tpu.memory_space<vmem>>, vector<384x128xf32>
    %cst = arith.constant dense<0.000000e+00> : vector<128x128xf32>
    %8 = tpu.matmul %6, %7, %cst {dimension_numbers = #tpu.dot_dimension_numbers<[1], [0], [0], [1], [0, 0, 1, 1], [], []>} : vector<128x384xf32>, vector<384x128xf32>, vector<128x128xf32> -> vector<128x128xf32>
    %c0_8 = arith.constant 0 : index
    %c0_9 = arith.constant 0 : index
    %9 = vector.load %arg3[%c0_8, %c0_9] : memref<1x128xf32, #tpu.memory_space<vmem>>, vector<1x128xf32>
    %10 = vector.broadcast %9 : vector<1x128xf32> to vector<128x128xf32>
    %11 = arith.addf %8, %10 : vector<128x128xf32>
    %cst_10 = arith.constant 5.000000e-01 : f32
    %12 = vector.broadcast %cst_10 : f32 to vector<128x128xf32>
    %13 = arith.mulf %12, %11 : vector<128x128xf32>
    %cst_11 = arith.constant 0.707106769 : f32
    %14 = vector.broadcast %cst_11 : f32 to vector<128x128xf32>
    %15 = arith.mulf %11, %14 : vector<128x128xf32>
    %16 = math.erf %15 : vector<128x128xf32>
    %cst_12 = arith.constant 1.000000e+00 : f32
    %17 = vector.broadcast %cst_12 : f32 to vector<128x128xf32>
    %18 = arith.addf %17, %16 : vector<128x128xf32>
    %19 = arith.mulf %13, %18 : vector<128x128xf32>
    %20 = vector.shape_cast %19 : vector<128x128xf32> to vector<32x4x128xf32>
    %cst_13 = arith.constant dense<0xFF800000> : vector<32x128xf32>
    %21 = vector.multi_reduction <maximumf>, %20, %cst_13 [1] : vector<32x4x128xf32> to vector<32x128xf32>
    %c0_14 = arith.constant 0 : index
    %c0_15 = arith.constant 0 : index
    %22 = vector.load %arg4[%c0_14, %c0_15] : memref<128x256xf32, #tpu.memory_space<vmem>>, vector<128x256xf32>
    %cst_16 = arith.constant dense<0.000000e+00> : vector<32x256xf32>
    %23 = tpu.matmul %21, %22, %cst_16 {dimension_numbers = #tpu.dot_dimension_numbers<[1], [0], [0], [1], [0, 0, 1, 1], [], []>} : vector<32x128xf32>, vector<128x256xf32>, vector<32x256xf32> -> vector<32x256xf32>
    %c0_17 = arith.constant 0 : index
    %c0_18 = arith.constant 0 : index
    %24 = vector.load %arg5[%c0_17, %c0_18] : memref<1x256xf32, #tpu.memory_space<vmem>>, vector<1x256xf32>
    %25 = vector.broadcast %24 : vector<1x256xf32> to vector<32x256xf32>
    %26 = arith.addf %23, %25 : vector<32x256xf32>
    %cst_19 = arith.constant 5.000000e-01 : f32
    %27 = vector.broadcast %cst_19 : f32 to vector<32x256xf32>
    %28 = arith.mulf %27, %26 : vector<32x256xf32>
    %cst_20 = arith.constant 0.707106769 : f32
    %29 = vector.broadcast %cst_20 : f32 to vector<32x256xf32>
    %30 = arith.mulf %26, %29 : vector<32x256xf32>
    %31 = math.erf %30 : vector<32x256xf32>
    %cst_21 = arith.constant 1.000000e+00 : f32
    %32 = vector.broadcast %cst_21 : f32 to vector<32x256xf32>
    %33 = arith.addf %32, %31 : vector<32x256xf32>
    %34 = arith.mulf %28, %33 : vector<32x256xf32>
    %c0_22 = arith.constant 0 : index
    %c0_23 = arith.constant 0 : index
    %35 = vector.load %arg6[%c0_22, %c0_23] : memref<32x256xf32, #tpu.memory_space<vmem>>, vector<32x256xf32>
    tpu.vector_store %arg6[%c0_22, %c0_23], %34 {strides = array<i32>} : memref<32x256xf32, #tpu.memory_space<vmem>>, vector<32x256xf32>,
    return
  }
  func.func @transform_0(%arg0: i32) -> (i32, i32, i32) {
    %c0_i32 = arith.constant 0 : i32
    %c0_i32_0 = arith.constant 0 : i32
    %c0_i32_1 = arith.constant 0 : i32
    return %arg0, %c0_i32, %c0_i32_0 : i32, i32, i32
  }
  func.func @transform_1(%arg0: i32) -> (i32, i32) {
    %c0_i32 = arith.constant 0 : i32
    %c0_i32_0 = arith.constant 0 : i32
    %c0_i32_1 = arith.constant 0 : i32
    return %c0_i32, %c0_i32_0 : i32, i32
  }
  func.func @transform_2(%arg0: i32) -> (i32, i32) {
    %c0_i32 = arith.constant 0 : i32
    %c0_i32_0 = arith.constant 0 : i32
    %c0_i32_1 = arith.constant 0 : i32
    return %c0_i32, %c0_i32_0 : i32, i32
  }
  func.func @transform_3(%arg0: i32) -> (i32, i32) {
    %c0_i32 = arith.constant 0 : i32
    %c0_i32_0 = arith.constant 0 : i32
    %c0_i32_1 = arith.constant 0 : i32
    return %c0_i32, %c0_i32_0 : i32, i32
  }
  func.func @transform_4(%arg0: i32) -> (i32, i32) {
    %c0_i32 = arith.constant 0 : i32
    %c0_i32_0 = arith.constant 0 : i32
    %c0_i32_1 = arith.constant 0 : i32
    return %c0_i32, %c0_i32_0 : i32, i32
  }
  func.func @transform_5(%arg0: i32) -> (i32, i32) {
    %c0_i32 = arith.constant 0 : i32
    %c0_i32_0 = arith.constant 0 : i32
    return %arg0, %c0_i32 : i32, i32
  }
}

</mosaic_0001>

<llo_original>
// kernel: tpu_custom_call.1
$region0: #{tpu_custom_call.1}
  #allocation0 [shape = 'u32[]', space=smem, size = 0x4, offset = 0x4, fixed_abs, tag = 'smem constant byte address 0x4 - core index']
  #allocation1 [shape = 'u32[72,128]{1,0:T(1,128)}', space=vmem, size = 0x9000, scoped, tag = 'internal scratch']
  %s0 = inlined_call_operand.vmem [shape: f32[8,34,128], index: 0, kind: input, shape index: {}]
  %s1 = inlined_call_operand.vmem [shape: f32[384,128], index: 1, kind: input, shape index: {}]
  %s2 = inlined_call_operand.vmem [shape: f32[1,128], index: 2, kind: input, shape index: {}]
  %s3 = inlined_call_operand.hbm [shape: f32[128,256], index: 3, kind: input, shape index: {}]
  %s4 = inlined_call_operand.vmem [shape: f32[1,256], index: 4, kind: input, shape index: {}]
  %s5 = inlined_call_operand.hbm [shape: f32[64,256], index: 5, kind: output, shape index: {}]
  %s6 = sld [smem:[#allocation0]]
  $region57: #{tpu_custom_call.1} parent=0
    _
  %s8 = ssub.s32 1, %s6
  %s9 = scalar_select 0, %s8, %s6
  $region1: #{tpu_custom_call.1} parent=0
    #allocation2 [shape = 'u8[131072]{0}', space=vmem, size = 0x20000, scoped, tag = 'input window, operand 3, single buffered']
    #allocation3 [shape = 's32[2]{0}', space=sflag, size = 0x8, scoped, tag = 'scoped memory for tpu_custom_call.1']
    #allocation4 [shape = 's32[2]{0}', space=sflag, size = 0x8, scoped, tag = 'scoped memory for tpu_custom_call.1']
    #allocation5 [shape = 'u8[65536]{0}', space=vmem, size = 0x10000, scoped, tag = 'output window, operand 0']
    %10 = vsyncpa [#allocation3], 0
    %11 = vsyncpa [#allocation4], 0
    %s12 = scalar_lea.sflag [#allocation4], 1
    %13 = vsyncpa %s12, 0
    loop: start=0, step=1, limit=4
    $region2: #{tpu_custom_call.1} parent=1 // loop_pre_header
      _
    $region3: #{tpu_custom_call.1} parent=1 // loop_header
      %s15 = sphi 0, %s19
      %p16 = scmp.ge.s32.totalorder %s15, 4
      %s25 = sphi 0, %s27
      %s28 = sphi 0, %s25
      %s29 = sphi 0, %s28
      %s45 = sphi 0, %s29
      %s49 = sphi 0, %s49
      %s51 = sphi 0, %s49
      %s52 = sphi 0, %s51
      %s66 = sphi 0, %s52
      %s70 = sphi 0, %s70
      %s72 = sphi 0, %s70
      %s73 = sphi 0, %s72
      %s87 = sphi 0, %s73
      %s91 = sphi 0, %s91
      %s93 = sphi 0, %s91
      %s94 = sphi 0, %s93
      %s108 = sphi 0, %s94
      %s112 = sphi 0, %s112
      %s114 = sphi 0, %s112
      %s115 = sphi 0, %s114
      %s129 = sphi 0, %s115
      %s135 = sphi 0, %s137
      %s138 = sphi 0, %s135
      %s139 = sphi 0, %s138
      %s155 = sphi 0, %s139
    $region4: #{tpu_custom_call.1} parent=1 // loop_header_branch
      %18 = sbr.rel (%p16) target = $region8
    $region5: #{tpu_custom_call.1} parent=1 // loop_body
      %s20 = ssub.s32 %s15, 1
      %s21 = ssub.s32 %s15, 2
      %s22 = sadd.s32 %s15, 1
      %s23 = ssub.s32 %s15, %s22
      %p24 = scmp.eq.s32.totalorder %s23, 0
      %s26 = sadd.s32 %s25, 1
      %s27 = scalar_select %p24, %s25, %s26
      %p30 = pneg %p24
      %p31 = scmp.eq.s32.totalorder %s15, 1
      %p32 = por %p30, %p31
      %p33 = scmp.ne.s32.totalorder %s25, %s28
      %p34 = scmp.eq.s32.totalorder %s15, 0
      %p35 = por %p33, %p34
      %p36 = scmp.ne.s32.totalorder %s25, %s28
      %p37 = scmp.eq.s32.totalorder %s20, 1
      %p38 = por %p36, %p37
      %p39 = scmp.ne.s32.totalorder %s28, %s29
      %p40 = scmp.eq.s32.totalorder %s20, 0
      %p41 = por %p39, %p40
      %p42 = scmp.ne.s32.totalorder %s28, %s29
      %p43 = scmp.eq.s32.totalorder %s21, 1
      %p44 = por %p42, %p43
      %p46 = scmp.ne.s32.totalorder %s29, %s45
      %p47 = scmp.eq.s32.totalorder %s21, 0
      %p48 = por %p46, %p47
      %s50 = sadd.s32 %s49, 1
      %p53 = scmp.eq.s32.totalorder %s15, 1
      %p54 = scmp.ne.s32.totalorder %s49, %s51
      %p55 = scmp.eq.s32.totalorder %s15, 0
      %p56 = por %p54, %p55
      %p57 = scmp.ne.s32.totalorder %s49, %s51
      %p58 = scmp.eq.s32.totalorder %s20, 1
      %p59 = por %p57, %p58
      %p60 = scmp.ne.s32.totalorder %s51, %s52
      %p61 = scmp.eq.s32.totalorder %s20, 0
      %p62 = por %p60, %p61
      %p63 = scmp.ne.s32.totalorder %s51, %s52
      %p64 = scmp.eq.s32.totalorder %s21, 1
      %p65 = por %p63, %p64
      %p67 = scmp.ne.s32.totalorder %s52, %s66
      %p68 = scmp.eq.s32.totalorder %s21, 0
      %p69 = por %p67, %p68
      %s71 = sadd.s32 %s70, 1
      %p74 = scmp.eq.s32.totalorder %s15, 1
      %p75 = scmp.ne.s32.totalorder %s70, %s72
      %p76 = scmp.eq.s32.totalorder %s15, 0
      %p77 = por %p75, %p76
      %p78 = scmp.ne.s32.totalorder %s70, %s72
      %p79 = scmp.eq.s32.totalorder %s20, 1
      %p80 = por %p78, %p79
      %p81 = scmp.ne.s32.totalorder %s72, %s73
      %p82 = scmp.eq.s32.totalorder %s20, 0
      %p83 = por %p81, %p82
      %p84 = scmp.ne.s32.totalorder %s72, %s73
      %p85 = scmp.eq.s32.totalorder %s21, 1
      %p86 = por %p84, %p85
      %p88 = scmp.ne.s32.totalorder %s73, %s87
      %p89 = scmp.eq.s32.totalorder %s21, 0
      %p90 = por %p88, %p89
      %s92 = sadd.s32 %s91, 1
      %p95 = scmp.eq.s32.totalorder %s15, 1
      %p96 = scmp.ne.s32.totalorder %s91, %s93
      %p97 = scmp.eq.s32.totalorder %s15, 0
      %p98 = por %p96, %p97
      %p99 = scmp.ne.s32.totalorder %s91, %s93
      %p100 = scmp.eq.s32.totalorder %s20, 1
      %p101 = por %p99, %p100
      %p102 = scmp.ne.s32.totalorder %s93, %s94
      %p103 = scmp.eq.s32.totalorder %s20, 0
      %p104 = por %p102, %p103
      %p105 = scmp.ne.s32.totalorder %s93, %s94
      %p106 = scmp.eq.s32.totalorder %s21, 1
      %p107 = por %p105, %p106
      %p109 = scmp.ne.s32.totalorder %s94, %s108
      %p110 = scmp.eq.s32.totalorder %s21, 0
      %p111 = por %p109, %p110
      %s113 = sadd.s32 %s112, 1
      %p116 = scmp.eq.s32.totalorder %s15, 1
      %p117 = scmp.ne.s32.totalorder %s112, %s114
      %p118 = scmp.eq.s32.totalorder %s15, 0
      %p119 = por %p117, %p118
      %p120 = scmp.ne.s32.totalorder %s112, %s114
      %p121 = scmp.eq.s32.totalorder %s20, 1
      %p122 = por %p120, %p121
      %p123 = scmp.ne.s32.totalorder %s114, %s115
      %p124 = scmp.eq.s32.totalorder %s20, 0
      %p125 = por %p123, %p124
      %p126 = scmp.ne.s32.totalorder %s114, %s115
      %p127 = scmp.eq.s32.totalorder %s21, 1
      %p128 = por %p126, %p127
      %p130 = scmp.ne.s32.totalorder %s115, %s129
      %p131 = scmp.eq.s32.totalorder %s21, 0
      %p132 = por %p130, %p131
      %s133 = ssub.s32 %s15, %s22
      %p134 = scmp.eq.s32.totalorder %s133, 0
      %s136 = sadd.s32 %s135, 1
      %s137 = scalar_select %p134, %s135, %s136
      %p140 = pneg %p134
      %p141 = scmp.eq.s32.totalorder %s15, 1
      %p142 = por %p140, %p141
      %p143 = scmp.ne.s32.totalorder %s135, %s138
      %p144 = scmp.eq.s32.totalorder %s15, 0
      %p145 = por %p143, %p144
      %p146 = scmp.ne.s32.totalorder %s135, %s138
      %p147 = scmp.eq.s32.totalorder %s20, 1
      %p148 = por %p146, %p147
      %p149 = scmp.ne.s32.totalorder %s138, %s139
      %p150 = scmp.eq.s32.totalorder %s20, 0
      %p151 = por %p149, %p150
      %p152 = scmp.ne.s32.totalorder %s138, %s139
      %p153 = scmp.eq.s32.totalorder %s21, 1
      %p154 = por %p152, %p153
      %p156 = scmp.ne.s32.totalorder %s139, %s155
      %p157 = scmp.eq.s32.totalorder %s21, 0
      %p158 = por %p156, %p157
      %p159 = scmp.le.s32.totalorder 1, %s15
      %p160 = scmp.lt.s32.totalorder %s15, 3
      %p161 = pnand %p159, %p160
      %p162 = pneg %p161
      // Predicated region
      $region9: #{tpu_custom_call.1} parent=5 // pred_check
        _
      $region10: #{tpu_custom_call.1} parent=5 // pred_check_branch
        %164 = sbr.rel (%p161) target = $region12
      $region11: #{tpu_custom_call.1} parent=5 // pred_region
        %s165 = ssub.s32 %s15, 1
        // Predicated region
        $region13: #{tpu_custom_call.1} parent=11 // pred_check
          %p166 = pneg %p62
        $region14: #{tpu_custom_call.1} parent=11 // pred_check_branch
          %168 = sbr.rel (%p166) target = $region16
        $region15: #{tpu_custom_call.1} parent=11 // pred_region
          _
        $region16: #{tpu_custom_call.1} parent=11 // pred_fallthru
          _
        // Predicated region
        $region17: #{tpu_custom_call.1} parent=11 // pred_check
          %p169 = pneg %p83
        $region18: #{tpu_custom_call.1} parent=11 // pred_check_branch
          %171 = sbr.rel (%p169) target = $region20
        $region19: #{tpu_custom_call.1} parent=11 // pred_region
          _
        $region20: #{tpu_custom_call.1} parent=11 // pred_fallthru
          _
        // Predicated region
        $region21: #{tpu_custom_call.1} parent=11 // pred_check
          %p172 = pneg %p104
        $region22: #{tpu_custom_call.1} parent=11 // pred_check_branch
          %174 = sbr.rel (%p172) target = $region24
        $region23: #{tpu_custom_call.1} parent=11 // pred_region
          %176 = vsyncadd [#allocation3], 0
          %s177 = sshll.u32 %s3, 4
          %s178 = int_to_ptr.hbm [resolvable:$true] %s177
          %s179 = sshll.u32 [#allocation2], 4
          %s180 = int_to_ptr.vmem [resolvable:$true] %s179
          %185 = dma.hbm_to_vmem [thread:$0]  %s178, 4096, %s180, [#allocation3], 256, 256, 16
        $region24: #{tpu_custom_call.1} parent=11 // pred_fallthru
          _
        // Predicated region
        $region25: #{tpu_custom_call.1} parent=11 // pred_check
          %p186 = pneg %p125
        $region26: #{tpu_custom_call.1} parent=11 // pred_check_branch
          %188 = sbr.rel (%p186) target = $region28
        $region27: #{tpu_custom_call.1} parent=11 // pred_region
          _
        $region28: #{tpu_custom_call.1} parent=11 // pred_fallthru
          _
      $region12: #{tpu_custom_call.1} parent=5 // pred_fallthru
        _
      %p189 = scmp.lt.s32.totalorder %s15, 2
      // Predicated region
      $region29: #{tpu_custom_call.1} parent=5 // pred_check
        %p190 = pneg %p189
      $region30: #{tpu_custom_call.1} parent=5 // pred_check_branch
        %192 = sbr.rel (%p190) target = $region32
      $region31: #{tpu_custom_call.1} parent=5 // pred_region
        // Predicated region
        $region33: #{tpu_custom_call.1} parent=31 // pred_check
          %p193 = pneg %p35
        $region34: #{tpu_custom_call.1} parent=31 // pred_check_branch
          %195 = sbr.rel (%p193) target = $region36
        $region35: #{tpu_custom_call.1} parent=31 // pred_region
          %s196 = smul.u32 4, %s15
          %p197 = scmp.lt.s32.totalorder %s196, 7
          %s198 = scalar_select %p197, %s196, 7
          %s199 = smul.addr %s198, 5
          %s200 = smul.addr %s199, 8
          %s201 = scalar_lea.vmem %s0, %s200
          %s202 = smul.u32 4, %s15
        $region36: #{tpu_custom_call.1} parent=31 // pred_fallthru
          _
      $region32: #{tpu_custom_call.1} parent=5 // pred_fallthru
        _
      %p203 = scmp.le.s32.totalorder 1, %s15
      %p204 = scmp.lt.s32.totalorder %s15, 3
      %p205 = pnand %p203, %p204
      %p206 = pneg %p205
      // Predicated region
      $region37: #{tpu_custom_call.1} parent=5 // pred_check
        _
      $region38: #{tpu_custom_call.1} parent=5 // pred_check_branch
        %208 = sbr.rel (%p205) target = $region40
      $region39: #{tpu_custom_call.1} parent=5 // pred_region
        %s209 = ssub.s32 %s15, 1
        // Predicated region
        $region41: #{tpu_custom_call.1} parent=39 // pred_check
          %p210 = pneg %p104
        $region42: #{tpu_custom_call.1} parent=39 // pred_check_branch
          %212 = sbr.rel (%p210) target = $region44
        $region43: #{tpu_custom_call.1} parent=39 // pred_region
          %214 = dma.done [#allocation3], 4096
        $region44: #{tpu_custom_call.1} parent=39 // pred_fallthru
          _
        %s215 = smul.u32 4, %s20
        %p216 = scmp.lt.s32.totalorder %s215, 7
        %s217 = scalar_select %p216, %s215, 7
        %s218 = smul.addr %s217, 5
        %s219 = smul.addr %s218, 8
        %s220 = scalar_lea.vmem %s0, %s219
        %p221 = pneg %p41
        %p222 = pneg %p38
        %p223 = pneg %p62
        %p224 = pneg %p59
        %p225 = pneg %p83
        %p226 = pneg %p80
        %p227 = pneg %p104
        %p228 = pneg %p101
        %p229 = pneg %p125
        %p230 = pneg %p122
        %p231 = pneg %p151
        %p232 = pneg %p148
        %s233 = sand.u32 %s138, 1
        %s234 = scalar_lea.sflag [#allocation4], %s233
        %s235 = sand.u32 %s138, 1
        %s236 = smul.addr %s235, 64
        %s237 = scalar_lea.vmem [#allocation5], %s236
        %s238 = smul.u32 4, %s20
        %p239 = scmp.lt.s32.totalorder %s238, 7
        %s240 = scalar_select %p239, %s238, 7
        %s241 = smul.addr %s240, 5
        %s242 = smul.addr %s241, 8
        %s243 = scalar_lea.vmem %s0, %s242
        %s244 = smul.u32 4, %s20
        %s245 = smul.u32 4, %s20
        %v246 = vld [vmem:[%s243] sm:$0xff]
        %v247 = vld [vmem:[%s243 + $0x8] sm:$0xff]
        %v248 = vld [vmem:[%s243 + $0x10] sm:$0xff]
        %v249 = vld [vmem:[%s243 + $0x18] sm:$0xff]
        %v250 = vld [vmem:[%s243 + $0x28] sm:$0xff]
        %v251 = vld [vmem:[%s243 + $0x30] sm:$0xff]
        %v252 = vld [vmem:[%s243 + $0x38] sm:$0xff]
        %v253 = vld [vmem:[%s243 + $0x40] sm:$0xff]
        %v254 = vld [vmem:[%s243 + $0x50] sm:$0xff]
        %v255 = vld [vmem:[%s243 + $0x58] sm:$0xff]
        %v256 = vld [vmem:[%s243 + $0x60] sm:$0xff]
        %v257 = vld [vmem:[%s243 + $0x68] sm:$0xff]
        %v258 = vld [vmem:[%s243 + $0x78] sm:$0xff]
        %v259 = vld [vmem:[%s243 + $0x80] sm:$0xff]
        %v260 = vld [vmem:[%s243 + $0x88] sm:$0xff]
        %v261 = vld [vmem:[%s243 + $0x90] sm:$0xff]
        %v262 = vld [vmem:[%s243 + $0x1] sm:$0xff]
        %v263 = vld [vmem:[%s243 + $0x9] sm:$0xff]
        %v264 = vld [vmem:[%s243 + $0x11] sm:$0xff]
        %v265 = vld [vmem:[%s243 + $0x19] sm:$0xff]
        %v266 = vld [vmem:[%s243 + $0x29] sm:$0xff]
        %v267 = vld [vmem:[%s243 + $0x31] sm:$0xff]
        %v268 = vld [vmem:[%s243 + $0x39] sm:$0xff]
        %v269 = vld [vmem:[%s243 + $0x41] sm:$0xff]
        %v270 = vld [vmem:[%s243 + $0x51] sm:$0xff]
        %v271 = vld [vmem:[%s243 + $0x59] sm:$0xff]
        %v272 = vld [vmem:[%s243 + $0x61] sm:$0xff]
        %v273 = vld [vmem:[%s243 + $0x69] sm:$0xff]
        %v274 = vld [vmem:[%s243 + $0x79] sm:$0xff]
        %v275 = vld [vmem:[%s243 + $0x81] sm:$0xff]
        %v276 = vld [vmem:[%s243 + $0x89] sm:$0xff]
        %v277 = vld [vmem:[%s243 + $0x91] sm:$0xff]
        %v278 = vld [vmem:[%s243 + $0x2] sm:$0xff]
        %v279 = vld [vmem:[%s243 + $0xa] sm:$0xff]
        %v280 = vld [vmem:[%s243 + $0x12] sm:$0xff]
        %v281 = vld [vmem:[%s243 + $0x1a] sm:$0xff]
        %v282 = vld [vmem:[%s243 + $0x2a] sm:$0xff]
        %v283 = vld [vmem:[%s243 + $0x32] sm:$0xff]
        %v284 = vld [vmem:[%s243 + $0x3a] sm:$0xff]
        %v285 = vld [vmem:[%s243 + $0x42] sm:$0xff]
        %v286 = vld [vmem:[%s243 + $0x52] sm:$0xff]
        %v287 = vld [vmem:[%s243 + $0x5a] sm:$0xff]
        %v288 = vld [vmem:[%s243 + $0x62] sm:$0xff]
        %v289 = vld [vmem:[%s243 + $0x6a] sm:$0xff]
        %v290 = vld [vmem:[%s243 + $0x7a] sm:$0xff]
        %v291 = vld [vmem:[%s243 + $0x82] sm:$0xff]
        %v292 = vld [vmem:[%s243 + $0x8a] sm:$0xff]
        %v293 = vld [vmem:[%s243 + $0x92] sm:$0xff]
        %v294 = vld [vmem:[%s1] sm:$0xff]
        %v295 = vld [vmem:[%s1 + $0x8] sm:$0xff]
        %v296 = vld [vmem:[%s1 + $0x10] sm:$0xff]
        %v297 = vld [vmem:[%s1 + $0x18] sm:$0xff]
        %v298 = vld [vmem:[%s1 + $0x20] sm:$0xff]
        %v299 = vld [vmem:[%s1 + $0x28] sm:$0xff]
        %v300 = vld [vmem:[%s1 + $0x30] sm:$0xff]
        %v301 = vld [vmem:[%s1 + $0x38] sm:$0xff]
        %v302 = vld [vmem:[%s1 + $0x40] sm:$0xff]
        %v303 = vld [vmem:[%s1 + $0x48] sm:$0xff]
        %v304 = vld [vmem:[%s1 + $0x50] sm:$0xff]
        %v305 = vld [vmem:[%s1 + $0x58] sm:$0xff]
        %v306 = vld [vmem:[%s1 + $0x60] sm:$0xff]
        %v307 = vld [vmem:[%s1 + $0x68] sm:$0xff]
        %v308 = vld [vmem:[%s1 + $0x70] sm:$0xff]
        %v309 = vld [vmem:[%s1 + $0x78] sm:$0xff]
        %v310 = vld [vmem:[%s1 + $0x80] sm:$0xff]
        %v311 = vld [vmem:[%s1 + $0x88] sm:$0xff]
        %v312 = vld [vmem:[%s1 + $0x90] sm:$0xff]
        %v313 = vld [vmem:[%s1 + $0x98] sm:$0xff]
        %v314 = vld [vmem:[%s1 + $0xa0] sm:$0xff]
        %v315 = vld [vmem:[%s1 + $0xa8] sm:$0xff]
        %v316 = vld [vmem:[%s1 + $0xb0] sm:$0xff]
        %v317 = vld [vmem:[%s1 + $0xb8] sm:$0xff]
        %v318 = vld [vmem:[%s1 + $0xc0] sm:$0xff]
        %v319 = vld [vmem:[%s1 + $0xc8] sm:$0xff]
        %v320 = vld [vmem:[%s1 + $0xd0] sm:$0xff]
        %v321 = vld [vmem:[%s1 + $0xd8] sm:$0xff]
        %v322 = vld [vmem:[%s1 + $0xe0] sm:$0xff]
        %v323 = vld [vmem:[%s1 + $0xe8] sm:$0xff]
        %v324 = vld [vmem:[%s1 + $0xf0] sm:$0xff]
        %v325 = vld [vmem:[%s1 + $0xf8] sm:$0xff]
        %v326 = vld [vmem:[%s1 + $0x100] sm:$0xff]
        %v327 = vld [vmem:[%s1 + $0x108] sm:$0xff]
        %v328 = vld [vmem:[%s1 + $0x110] sm:$0xff]
        %v329 = vld [vmem:[%s1 + $0x118] sm:$0xff]
        %v330 = vld [vmem:[%s1 + $0x120] sm:$0xff]
        %v331 = vld [vmem:[%s1 + $0x128] sm:$0xff]
        %v332 = vld [vmem:[%s1 + $0x130] sm:$0xff]
        %v333 = vld [vmem:[%s1 + $0x138] sm:$0xff]
        %v334 = vld [vmem:[%s1 + $0x140] sm:$0xff]
        %v335 = vld [vmem:[%s1 + $0x148] sm:$0xff]
        %v336 = vld [vmem:[%s1 + $0x150] sm:$0xff]
        %v337 = vld [vmem:[%s1 + $0x158] sm:$0xff]
        %v338 = vld [vmem:[%s1 + $0x160] sm:$0xff]
        %v339 = vld [vmem:[%s1 + $0x168] sm:$0xff]
        %v340 = vld [vmem:[%s1 + $0x170] sm:$0xff]
        %v341 = vld [vmem:[%s1 + $0x178] sm:$0xff]
        %v342 = vld [vmem:[%s2] sm:$0x1]
        %v344 = vperm.slane %v342, 0
        %346 = vmatpush.msra.mxu0 %v309
        %347 = vmatpush.msra.mxu0 %v308
        %348 = vmatpush.msra.mxu0 %v307
        %349 = vmatpush.msra.mxu0 %v306
        %350 = vmatpush.msra.mxu0 %v305
        %351 = vmatpush.msra.mxu0 %v304
        %352 = vmatpush.msra.mxu0 %v303
        %353 = vmatpush.msra.mxu0 %v302
        %354 = vmatpush.msra.mxu0 %v301
        %355 = vmatpush.msra.mxu0 %v300
        %356 = vmatpush.msra.mxu0 %v299
        %357 = vmatpush.msra.mxu0 %v298
        %358 = vmatpush.msra.mxu0 %v297
        %359 = vmatpush.msra.mxu0 %v296
        %360 = vmatpush.msra.mxu0 %v295
        %361 = vmatpush.msra.mxu0 %v294
        %362 = vmatmul.f32.gmra.mxu0 %v246
        %v363 = vpop.f32.mrf.mxu0
        %v364 = vadd.f32 %v344, %v363
        %365 = vmatmul.f32.gmra.mxu0 %v247
        %v366 = vpop.f32.mrf.mxu0
        %v367 = vadd.f32 %v344, %v366
        %368 = vmatmul.f32.gmra.mxu0 %v248
        %v369 = vpop.f32.mrf.mxu0
        %v370 = vadd.f32 %v344, %v369
        %371 = vmatmul.f32.gmra.mxu0 %v249
        %v372 = vpop.f32.mrf.mxu0
        %v373 = vadd.f32 %v344, %v372
        %374 = vmatmul.f32.gmra.mxu0 %v250
        %v375 = vpop.f32.mrf.mxu0
        %v376 = vadd.f32 %v344, %v375
        %377 = vmatmul.f32.gmra.mxu0 %v251
        %v378 = vpop.f32.mrf.mxu0
        %v379 = vadd.f32 %v344, %v378
        %380 = vmatmul.f32.gmra.mxu0 %v252
        %v381 = vpop.f32.mrf.mxu0
        %v382 = vadd.f32 %v344, %v381
        %383 = vmatmul.f32.gmra.mxu0 %v253
        %v384 = vpop.f32.mrf.mxu0
        %v385 = vadd.f32 %v344, %v384
        %386 = vmatmul.f32.gmra.mxu0 %v254
        %v387 = vpop.f32.mrf.mxu0
        %v388 = vadd.f32 %v344, %v387
        %389 = vmatmul.f32.gmra.mxu0 %v255
        %v390 = vpop.f32.mrf.mxu0
        %v391 = vadd.f32 %v344, %v390
        %392 = vmatmul.f32.gmra.mxu0 %v256
        %v393 = vpop.f32.mrf.mxu0
        %v394 = vadd.f32 %v344, %v393
        %395 = vmatmul.f32.gmra.mxu0 %v257
        %v396 = vpop.f32.mrf.mxu0
        %v397 = vadd.f32 %v344, %v396
        %398 = vmatmul.f32.gmra.mxu0 %v258
        %v399 = vpop.f32.mrf.mxu0
        %v400 = vadd.f32 %v344, %v399
        %401 = vmatmul.f32.gmra.mxu0 %v259
        %v402 = vpop.f32.mrf.mxu0
        %v403 = vadd.f32 %v344, %v402
        %404 = vmatmul.f32.gmra.mxu0 %v260
        %v405 = vpop.f32.mrf.mxu0
        %v406 = vadd.f32 %v344, %v405
        %407 = vmatmul.f32.gmra.mxu0 %v261
        %v408 = vpop.f32.mrf.mxu0
        %v409 = vadd.f32 %v344, %v408
        %410 = vdwg.mxu0
        %411 = vmatpush.msra.mxu0 %v325
        %412 = vmatpush.msra.mxu0 %v324
        %413 = vmatpush.msra.mxu0 %v323
        %414 = vmatpush.msra.mxu0 %v322
        %415 = vmatpush.msra.mxu0 %v321
        %416 = vmatpush.msra.mxu0 %v320
        %417 = vmatpush.msra.mxu0 %v319
        %418 = vmatpush.msra.mxu0 %v318
        %419 = vmatpush.msra.mxu0 %v317
        %420 = vmatpush.msra.mxu0 %v316
        %421 = vmatpush.msra.mxu0 %v315
        %422 = vmatpush.msra.mxu0 %v314
        %423 = vmatpush.msra.mxu0 %v313
        %424 = vmatpush.msra.mxu0 %v312
        %425 = vmatpush.msra.mxu0 %v311
        %426 = vmatpush.msra.mxu0 %v310
        %427 = vmatmul.f32.gmra.mxu0 %v262
        %v428 = vpop.f32.mrf.mxu0
        %v429 = vadd.f32 %v364, %v428
        %430 = vmatmul.f32.gmra.mxu0 %v263
        %v431 = vpop.f32.mrf.mxu0
        %v432 = vadd.f32 %v367, %v431
        %433 = vmatmul.f32.gmra.mxu0 %v264
        %v434 = vpop.f32.mrf.mxu0
        %v435 = vadd.f32 %v370, %v434
        %436 = vmatmul.f32.gmra.mxu0 %v265
        %v437 = vpop.f32.mrf.mxu0
        %v438 = vadd.f32 %v373, %v437
        %439 = vmatmul.f32.gmra.mxu0 %v266
        %v440 = vpop.f32.mrf.mxu0
        %v441 = vadd.f32 %v376, %v440
        %442 = vmatmul.f32.gmra.mxu0 %v267
        %v443 = vpop.f32.mrf.mxu0
        %v444 = vadd.f32 %v379, %v443
        %445 = vmatmul.f32.gmra.mxu0 %v268
        %v446 = vpop.f32.mrf.mxu0
        %v447 = vadd.f32 %v382, %v446
        %448 = vmatmul.f32.gmra.mxu0 %v269
        %v449 = vpop.f32.mrf.mxu0
        %v450 = vadd.f32 %v385, %v449
        %451 = vmatmul.f32.gmra.mxu0 %v270
        %v452 = vpop.f32.mrf.mxu0
        %v453 = vadd.f32 %v388, %v452
        %454 = vmatmul.f32.gmra.mxu0 %v271
        %v455 = vpop.f32.mrf.mxu0
        %v456 = vadd.f32 %v391, %v455
        %457 = vmatmul.f32.gmra.mxu0 %v272
        %v458 = vpop.f32.mrf.mxu0
        %v459 = vadd.f32 %v394, %v458
        %460 = vmatmul.f32.gmra.mxu0 %v273
        %v461 = vpop.f32.mrf.mxu0
        %v462 = vadd.f32 %v397, %v461
        %463 = vmatmul.f32.gmra.mxu0 %v274
        %v464 = vpop.f32.mrf.mxu0
        %v465 = vadd.f32 %v400, %v464
        %466 = vmatmul.f32.gmra.mxu0 %v275
        %v467 = vpop.f32.mrf.mxu0
        %v468 = vadd.f32 %v403, %v467
        %469 = vmatmul.f32.gmra.mxu0 %v276
        %v470 = vpop.f32.mrf.mxu0
        %v471 = vadd.f32 %v406, %v470
        %472 = vmatmul.f32.gmra.mxu0 %v277
        %v473 = vpop.f32.mrf.mxu0
        %v474 = vadd.f32 %v409, %v473
        %475 = vdwg.mxu0
        %476 = vmatpush.msra.mxu0 %v341
        %477 = vmatpush.msra.mxu0 %v340
        %478 = vmatpush.msra.mxu0 %v339
        %479 = vmatpush.msra.mxu0 %v338
        %480 = vmatpush.msra.mxu0 %v337
        %481 = vmatpush.msra.mxu0 %v336
        %482 = vmatpush.msra.mxu0 %v335
        %483 = vmatpush.msra.mxu0 %v334
        %484 = vmatpush.msra.mxu0 %v333
        %485 = vmatpush.msra.mxu0 %v332
        %486 = vmatpush.msra.mxu0 %v331
        %487 = vmatpush.msra.mxu0 %v330
        %488 = vmatpush.msra.mxu0 %v329
        %489 = vmatpush.msra.mxu0 %v328
        %490 = vmatpush.msra.mxu0 %v327
        %491 = vmatpush.msra.mxu0 %v326
        %492 = vmatmul.f32.gmra.mxu0 %v278
        %v493 = vpop.f32.mrf.mxu0
        %v494 = vadd.f32 %v429, %v493
        %495 = vmatmul.f32.gmra.mxu0 %v279
        %v496 = vpop.f32.mrf.mxu0
        %v497 = vadd.f32 %v432, %v496
        %498 = vmatmul.f32.gmra.mxu0 %v280
        %v499 = vpop.f32.mrf.mxu0
        %v500 = vadd.f32 %v435, %v499
        %501 = vmatmul.f32.gmra.mxu0 %v281
        %v502 = vpop.f32.mrf.mxu0
        %v503 = vadd.f32 %v438, %v502
        %504 = vmatmul.f32.gmra.mxu0 %v282
        %v505 = vpop.f32.mrf.mxu0
        %v506 = vadd.f32 %v441, %v505
        %507 = vmatmul.f32.gmra.mxu0 %v283
        %v508 = vpop.f32.mrf.mxu0
        %v509 = vadd.f32 %v444, %v508
        %510 = vmatmul.f32.gmra.mxu0 %v284
        %v511 = vpop.f32.mrf.mxu0
        %v512 = vadd.f32 %v447, %v511
        %513 = vmatmul.f32.gmra.mxu0 %v285
        %v514 = vpop.f32.mrf.mxu0
        %v515 = vadd.f32 %v450, %v514
        %516 = vmatmul.f32.gmra.mxu0 %v286
        %v517 = vpop.f32.mrf.mxu0
        %v518 = vadd.f32 %v453, %v517
        %519 = vmatmul.f32.gmra.mxu0 %v287
        %v520 = vpop.f32.mrf.mxu0
        %v521 = vadd.f32 %v456, %v520
        %522 = vmatmul.f32.gmra.mxu0 %v288
        %v523 = vpop.f32.mrf.mxu0
        %v524 = vadd.f32 %v459, %v523
        %525 = vmatmul.f32.gmra.mxu0 %v289
        %v526 = vpop.f32.mrf.mxu0
        %v527 = vadd.f32 %v462, %v526
        %528 = vmatmul.f32.gmra.mxu0 %v290
        %v529 = vpop.f32.mrf.mxu0
        %v530 = vadd.f32 %v465, %v529
        %531 = vmatmul.f32.gmra.mxu0 %v291
        %v532 = vpop.f32.mrf.mxu0
        %v533 = vadd.f32 %v468, %v532
        %534 = vmatmul.f32.gmra.mxu0 %v292
        %v535 = vpop.f32.mrf.mxu0
        %v536 = vadd.f32 %v471, %v535
        %537 = vmatmul.f32.gmra.mxu0 %v293
        %v538 = vpop.f32.mrf.mxu0
        %v539 = vadd.f32 %v474, %v538
        %540 = vdwg.mxu0
        %v541 = vmul.f32 %v494, 0.5
        %v542 = vmul.f32 %v497, 0.5
        %v543 = vmul.f32 %v500, 0.5
        %v544 = vmul.f32 %v503, 0.5
        %v545 = vmul.f32 %v506, 0.5
        %v546 = vmul.f32 %v509, 0.5
        %v547 = vmul.f32 %v512, 0.5
        %v548 = vmul.f32 %v515, 0.5
        %v549 = vmul.f32 %v518, 0.5
        %v550 = vmul.f32 %v521, 0.5
        %v551 = vmul.f32 %v524, 0.5
        %v552 = vmul.f32 %v527, 0.5
        %v553 = vmul.f32 %v530, 0.5
        %v554 = vmul.f32 %v533, 0.5
        %v555 = vmul.f32 %v536, 0.5
        %v556 = vmul.f32 %v539, 0.5
        %v557 = vmul.f32 %v494, 0.70710677
        %v558 = vmul.f32 %v497, 0.70710677
        %v559 = vmul.f32 %v500, 0.70710677
        %v560 = vmul.f32 %v503, 0.70710677
        %v561 = vmul.f32 %v506, 0.70710677
        %v562 = vmul.f32 %v509, 0.70710677
        %v563 = vmul.f32 %v512, 0.70710677
        %v564 = vmul.f32 %v515, 0.70710677
        %v565 = vmul.f32 %v518, 0.70710677
        %v566 = vmul.f32 %v521, 0.70710677
        %v567 = vmul.f32 %v524, 0.70710677
        %v568 = vmul.f32 %v527, 0.70710677
        %v569 = vmul.f32 %v530, 0.70710677
        %v570 = vmul.f32 %v533, 0.70710677
        %v571 = vmul.f32 %v536, 0.70710677
        %v572 = vmul.f32 %v539, 0.70710677
        %v573 = vmul.f32 %v557, %v557
        %v574 = vmin.f32 16.0, %v573
        %v575 = vmul.f32 %v574, 2.1237322e-06
        %v576 = vadd.f32 %v575, 0.00028619796
        %v577 = vmul.f32 %v574, %v576
        %v578 = vadd.f32 %v577, 0.0036580483
        %v579 = vmul.f32 %v574, %v578
        %v580 = vadd.f32 %v579, 0.05243302
        %v581 = vmul.f32 %v574, %v580
        %v582 = vadd.f32 %v581, 0.18741608
        %v583 = vmul.f32 %v574, %v582
        %v584 = vadd.f32 %v583, 1.1283791
        %v585 = vmul.f32 %v557, %v584
        %v586 = vmul.f32 %v574, 3.8918573e-05
        %v587 = vadd.f32 %v586, 0.001143296
        %v588 = vmul.f32 %v574, %v587
        %v589 = vadd.f32 %v588, 0.014752088
        %v590 = vmul.f32 %v574, %v589
        %v591 = vadd.f32 %v590, 0.112945676
        %v592 = vmul.f32 %v574, %v591
        %v593 = vadd.f32 %v592, 0.4994258
        %v594 = vmul.f32 %v574, %v593
        %v595 = vadd.f32 %v594, 1.0
        %v596 = vrcp.pop %v595
        %v597 = vmul.f32 %v595, %v596
        %v598 = vsub.f32 1.0, %v597
        %v599 = vmul.f32 %v596, %v598
        %v600 = vadd.f32 %v596, %v599
        %vm601 = vweird.f32 %v595
        %vm602 = vweird.f32 %v596
        %vm603 = vmor %vm601, %vm602
        %v604 = vsel %vm603, %v596, %v600
        %v605 = vand.u32 2147483647, %v595
        %vm606 = vcmp.eq.f32.partialorder %v605, 8.507059e+37
        %v607 = vand.u32 %v595, 2147483648
        %v608 = vor.u32 1.1754944e-38, %v607
        %v609 = vsel %vm606, %v608, %v604
        %v610 = vmul.f32 %v585, %v609
        %v611 = vmin.f32 %v610, 1.0
        %v612 = vmax.f32 %v611, -1.0
        %v613 = vmul.f32 %v558, %v558
        %v614 = vmin.f32 16.0, %v613
        %v615 = vmul.f32 %v614, 2.1237322e-06
        %v616 = vadd.f32 %v615, 0.00028619796
        %v617 = vmul.f32 %v614, %v616
        %v618 = vadd.f32 %v617, 0.0036580483
        %v619 = vmul.f32 %v614, %v618
        %v620 = vadd.f32 %v619, 0.05243302
        %v621 = vmul.f32 %v614, %v620
        %v622 = vadd.f32 %v621, 0.18741608
        %v623 = vmul.f32 %v614, %v622
        %v624 = vadd.f32 %v623, 1.1283791
        %v625 = vmul.f32 %v558, %v624
        %v626 = vmul.f32 %v614, 3.8918573e-05
        %v627 = vadd.f32 %v626, 0.001143296
        %v628 = vmul.f32 %v614, %v627
        %v629 = vadd.f32 %v628, 0.014752088
        %v630 = vmul.f32 %v614, %v629
        %v631 = vadd.f32 %v630, 0.112945676
        %v632 = vmul.f32 %v614, %v631
        %v633 = vadd.f32 %v632, 0.4994258
        %v634 = vmul.f32 %v614, %v633
        %v635 = vadd.f32 %v634, 1.0
        %v636 = vrcp.pop %v635
        %v637 = vmul.f32 %v635, %v636
        %v638 = vsub.f32 1.0, %v637
        %v639 = vmul.f32 %v636, %v638
        %v640 = vadd.f32 %v636, %v639
        %vm641 = vweird.f32 %v635
        %vm642 = vweird.f32 %v636
        %vm643 = vmor %vm641, %vm642
        %v644 = vsel %vm643, %v636, %v640
        %v645 = vand.u32 2147483647, %v635
        %vm646 = vcmp.eq.f32.partialorder %v645, 8.507059e+37
        %v647 = vand.u32 %v635, 2147483648
        %v648 = vor.u32 1.1754944e-38, %v647
        %v649 = vsel %vm646, %v648, %v644
        %v650 = vmul.f32 %v625, %v649
        %v651 = vmin.f32 %v650, 1.0
        %v652 = vmax.f32 %v651, -1.0
        %v653 = vmul.f32 %v559, %v559
        %v654 = vmin.f32 16.0, %v653
        %v655 = vmul.f32 %v654, 2.1237322e-06
        %v656 = vadd.f32 %v655, 0.00028619796
        %v657 = vmul.f32 %v654, %v656
        %v658 = vadd.f32 %v657, 0.0036580483
        %v659 = vmul.f32 %v654, %v658
        %v660 = vadd.f32 %v659, 0.05243302
        %v661 = vmul.f32 %v654, %v660
        %v662 = vadd.f32 %v661, 0.18741608
        %v663 = vmul.f32 %v654, %v662
        %v664 = vadd.f32 %v663, 1.1283791
        %v665 = vmul.f32 %v559, %v664
        %v666 = vmul.f32 %v654, 3.8918573e-05
        %v667 = vadd.f32 %v666, 0.001143296
        %v668 = vmul.f32 %v654, %v667
        %v669 = vadd.f32 %v668, 0.014752088
        %v670 = vmul.f32 %v654, %v669
        %v671 = vadd.f32 %v670, 0.112945676
        %v672 = vmul.f32 %v654, %v671
        %v673 = vadd.f32 %v672, 0.4994258
        %v674 = vmul.f32 %v654, %v673
        %v675 = vadd.f32 %v674, 1.0
        %v676 = vrcp.pop %v675
        %v677 = vmul.f32 %v675, %v676
        %v678 = vsub.f32 1.0, %v677
        %v679 = vmul.f32 %v676, %v678
        %v680 = vadd.f32 %v676, %v679
        %vm681 = vweird.f32 %v675
        %vm682 = vweird.f32 %v676
        %vm683 = vmor %vm681, %vm682
        %v684 = vsel %vm683, %v676, %v680
        %v685 = vand.u32 2147483647, %v675
        %vm686 = vcmp.eq.f32.partialorder %v685, 8.507059e+37
        %v687 = vand.u32 %v675, 2147483648
        %v688 = vor.u32 1.1754944e-38, %v687
        %v689 = vsel %vm686, %v688, %v684
        %v690 = vmul.f32 %v665, %v689
        %v691 = vmin.f32 %v690, 1.0
        %v692 = vmax.f32 %v691, -1.0
        %v693 = vmul.f32 %v560, %v560
        %v694 = vmin.f32 16.0, %v693
        %v695 = vmul.f32 %v694, 2.1237322e-06
        %v696 = vadd.f32 %v695, 0.00028619796
        %v697 = vmul.f32 %v694, %v696
        %v698 = vadd.f32 %v697, 0.0036580483
        %v699 = vmul.f32 %v694, %v698
        %v700 = vadd.f32 %v699, 0.05243302
        %v701 = vmul.f32 %v694, %v700
        %v702 = vadd.f32 %v701, 0.18741608
        %v703 = vmul.f32 %v694, %v702
        %v704 = vadd.f32 %v703, 1.1283791
        %v705 = vmul.f32 %v560, %v704
        %v706 = vmul.f32 %v694, 3.8918573e-05
        %v707 = vadd.f32 %v706, 0.001143296
        %v708 = vmul.f32 %v694, %v707
        %v709 = vadd.f32 %v708, 0.014752088
        %v710 = vmul.f32 %v694, %v709
        %v711 = vadd.f32 %v710, 0.112945676
        %v712 = vmul.f32 %v694, %v711
        %v713 = vadd.f32 %v712, 0.4994258
        %v714 = vmul.f32 %v694, %v713
        %v715 = vadd.f32 %v714, 1.0
        %v716 = vrcp.pop %v715
        %v717 = vmul.f32 %v715, %v716
        %v718 = vsub.f32 1.0, %v717
        %v719 = vmul.f32 %v716, %v718
        %v720 = vadd.f32 %v716, %v719
        %vm721 = vweird.f32 %v715
        %vm722 = vweird.f32 %v716
        %vm723 = vmor %vm721, %vm722
        %v724 = vsel %vm723, %v716, %v720
        %v725 = vand.u32 2147483647, %v715
        %vm726 = vcmp.eq.f32.partialorder %v725, 8.507059e+37
        %v727 = vand.u32 %v715, 2147483648
        %v728 = vor.u32 1.1754944e-38, %v727
        %v729 = vsel %vm726, %v728, %v724
        %v730 = vmul.f32 %v705, %v729
        %v731 = vmin.f32 %v730, 1.0
        %v732 = vmax.f32 %v731, -1.0
        %v733 = vmul.f32 %v561, %v561
        %v734 = vmin.f32 16.0, %v733
        %v735 = vmul.f32 %v734, 2.1237322e-06
        %v736 = vadd.f32 %v735, 0.00028619796
        %v737 = vmul.f32 %v734, %v736
        %v738 = vadd.f32 %v737, 0.0036580483
        %v739 = vmul.f32 %v734, %v738
        %v740 = vadd.f32 %v739, 0.05243302
        %v741 = vmul.f32 %v734, %v740
        %v742 = vadd.f32 %v741, 0.18741608
        %v743 = vmul.f32 %v734, %v742
        %v744 = vadd.f32 %v743, 1.1283791
        %v745 = vmul.f32 %v561, %v744
        %v746 = vmul.f32 %v734, 3.8918573e-05
        %v747 = vadd.f32 %v746, 0.001143296
        %v748 = vmul.f32 %v734, %v747
        %v749 = vadd.f32 %v748, 0.014752088
        %v750 = vmul.f32 %v734, %v749
        %v751 = vadd.f32 %v750, 0.112945676
        %v752 = vmul.f32 %v734, %v751
        %v753 = vadd.f32 %v752, 0.4994258
        %v754 = vmul.f32 %v734, %v753
        %v755 = vadd.f32 %v754, 1.0
        %v756 = vrcp.pop %v755
        %v757 = vmul.f32 %v755, %v756
        %v758 = vsub.f32 1.0, %v757
        %v759 = vmul.f32 %v756, %v758
        %v760 = vadd.f32 %v756, %v759
        %vm761 = vweird.f32 %v755
        %vm762 = vweird.f32 %v756
        %vm763 = vmor %vm761, %vm762
        %v764 = vsel %vm763, %v756, %v760
        %v765 = vand.u32 2147483647, %v755
        %vm766 = vcmp.eq.f32.partialorder %v765, 8.507059e+37
        %v767 = vand.u32 %v755, 2147483648
        %v768 = vor.u32 1.1754944e-38, %v767
        %v769 = vsel %vm766, %v768, %v764
        %v770 = vmul.f32 %v745, %v769
        %v771 = vmin.f32 %v770, 1.0
        %v772 = vmax.f32 %v771, -1.0
        %v773 = vmul.f32 %v562, %v562
        %v774 = vmin.f32 16.0, %v773
        %v775 = vmul.f32 %v774, 2.1237322e-06
        %v776 = vadd.f32 %v775, 0.00028619796
        %v777 = vmul.f32 %v774, %v776
        %v778 = vadd.f32 %v777, 0.0036580483
        %v779 = vmul.f32 %v774, %v778
        %v780 = vadd.f32 %v779, 0.05243302
        %v781 = vmul.f32 %v774, %v780
        %v782 = vadd.f32 %v781, 0.18741608
        %v783 = vmul.f32 %v774, %v782
        %v784 = vadd.f32 %v783, 1.1283791
        %v785 = vmul.f32 %v562, %v784
        %v786 = vmul.f32 %v774, 3.8918573e-05
        %v787 = vadd.f32 %v786, 0.001143296
        %v788 = vmul.f32 %v774, %v787
        %v789 = vadd.f32 %v788, 0.014752088
        %v790 = vmul.f32 %v774, %v789
        %v791 = vadd.f32 %v790, 0.112945676
        %v792 = vmul.f32 %v774, %v791
        %v793 = vadd.f32 %v792, 0.4994258
        %v794 = vmul.f32 %v774, %v793
        %v795 = vadd.f32 %v794, 1.0
        %v796 = vrcp.pop %v795
        %v797 = vmul.f32 %v795, %v796
        %v798 = vsub.f32 1.0, %v797
        %v799 = vmul.f32 %v796, %v798
        %v800 = vadd.f32 %v796, %v799
        %vm801 = vweird.f32 %v795
        %vm802 = vweird.f32 %v796
        %vm803 = vmor %vm801, %vm802
        %v804 = vsel %vm803, %v796, %v800
        %v805 = vand.u32 2147483647, %v795
        %vm806 = vcmp.eq.f32.partialorder %v805, 8.507059e+37
        %v807 = vand.u32 %v795, 2147483648
        %v808 = vor.u32 1.1754944e-38, %v807
        %v809 = vsel %vm806, %v808, %v804
        %v810 = vmul.f32 %v785, %v809
        %v811 = vmin.f32 %v810, 1.0
        %v812 = vmax.f32 %v811, -1.0
        %v813 = vmul.f32 %v563, %v563
        %v814 = vmin.f32 16.0, %v813
        %v815 = vmul.f32 %v814, 2.1237322e-06
        %v816 = vadd.f32 %v815, 0.00028619796
        %v817 = vmul.f32 %v814, %v816
        %v818 = vadd.f32 %v817, 0.0036580483
        %v819 = vmul.f32 %v814, %v818
        %v820 = vadd.f32 %v819, 0.05243302
        %v821 = vmul.f32 %v814, %v820
        %v822 = vadd.f32 %v821, 0.18741608
        %v823 = vmul.f32 %v814, %v822
        %v824 = vadd.f32 %v823, 1.1283791
        %v825 = vmul.f32 %v563, %v824
        %v826 = vmul.f32 %v814, 3.8918573e-05
        %v827 = vadd.f32 %v826, 0.001143296
        %v828 = vmul.f32 %v814, %v827
        %v829 = vadd.f32 %v828, 0.014752088
        %v830 = vmul.f32 %v814, %v829
        %v831 = vadd.f32 %v830, 0.112945676
        %v832 = vmul.f32 %v814, %v831
        %v833 = vadd.f32 %v832, 0.4994258
        %v834 = vmul.f32 %v814, %v833
        %v835 = vadd.f32 %v834, 1.0
        %v836 = vrcp.pop %v835
        %v837 = vmul.f32 %v835, %v836
        %v838 = vsub.f32 1.0, %v837
        %v839 = vmul.f32 %v836, %v838
        %v840 = vadd.f32 %v836, %v839
        %vm841 = vweird.f32 %v835
        %vm842 = vweird.f32 %v836
        %vm843 = vmor %vm841, %vm842
        %v844 = vsel %vm843, %v836, %v840
        %v845 = vand.u32 2147483647, %v835
        %vm846 = vcmp.eq.f32.partialorder %v845, 8.507059e+37
        %v847 = vand.u32 %v835, 2147483648
        %v848 = vor.u32 1.1754944e-38, %v847
        %v849 = vsel %vm846, %v848, %v844
        %v850 = vmul.f32 %v825, %v849
        %v851 = vmin.f32 %v850, 1.0
        %v852 = vmax.f32 %v851, -1.0
        %v853 = vmul.f32 %v564, %v564
        %v854 = vmin.f32 16.0, %v853
        %v855 = vmul.f32 %v854, 2.1237322e-06
        %v856 = vadd.f32 %v855, 0.00028619796
        %v857 = vmul.f32 %v854, %v856
        %v858 = vadd.f32 %v857, 0.0036580483
        %v859 = vmul.f32 %v854, %v858
        %v860 = vadd.f32 %v859, 0.05243302
        %v861 = vmul.f32 %v854, %v860
        %v862 = vadd.f32 %v861, 0.18741608
        %v863 = vmul.f32 %v854, %v862
        %v864 = vadd.f32 %v863, 1.1283791
        %v865 = vmul.f32 %v564, %v864
        %v866 = vmul.f32 %v854, 3.8918573e-05
        %v867 = vadd.f32 %v866, 0.001143296
        %v868 = vmul.f32 %v854, %v867
        %v869 = vadd.f32 %v868, 0.014752088
        %v870 = vmul.f32 %v854, %v869
        %v871 = vadd.f32 %v870, 0.112945676
        %v872 = vmul.f32 %v854, %v871
        %v873 = vadd.f32 %v872, 0.4994258
        %v874 = vmul.f32 %v854, %v873
        %v875 = vadd.f32 %v874, 1.0
        %v876 = vrcp.pop %v875
        %v877 = vmul.f32 %v875, %v876
        %v878 = vsub.f32 1.0, %v877
        %v879 = vmul.f32 %v876, %v878
        %v880 = vadd.f32 %v876, %v879
        %vm881 = vweird.f32 %v875
        %vm882 = vweird.f32 %v876
        %vm883 = vmor %vm881, %vm882
        %v884 = vsel %vm883, %v876, %v880
        %v885 = vand.u32 2147483647, %v875
        %vm886 = vcmp.eq.f32.partialorder %v885, 8.507059e+37
        %v887 = vand.u32 %v875, 2147483648
        %v888 = vor.u32 1.1754944e-38, %v887
        %v889 = vsel %vm886, %v888, %v884
        %v890 = vmul.f32 %v865, %v889
        %v891 = vmin.f32 %v890, 1.0
        %v892 = vmax.f32 %v891, -1.0
        %v893 = vmul.f32 %v565, %v565
        %v894 = vmin.f32 16.0, %v893
        %v895 = vmul.f32 %v894, 2.1237322e-06
        %v896 = vadd.f32 %v895, 0.00028619796
        %v897 = vmul.f32 %v894, %v896
        %v898 = vadd.f32 %v897, 0.0036580483
        %v899 = vmul.f32 %v894, %v898
        %v900 = vadd.f32 %v899, 0.05243302
        %v901 = vmul.f32 %v894, %v900
        %v902 = vadd.f32 %v901, 0.18741608
        %v903 = vmul.f32 %v894, %v902
        %v904 = vadd.f32 %v903, 1.1283791
        %v905 = vmul.f32 %v565, %v904
        %v906 = vmul.f32 %v894, 3.8918573e-05
        %v907 = vadd.f32 %v906, 0.001143296
        %v908 = vmul.f32 %v894, %v907
        %v909 = vadd.f32 %v908, 0.014752088
        %v910 = vmul.f32 %v894, %v909
        %v911 = vadd.f32 %v910, 0.112945676
        %v912 = vmul.f32 %v894, %v911
        %v913 = vadd.f32 %v912, 0.4994258
        %v914 = vmul.f32 %v894, %v913
        %v915 = vadd.f32 %v914, 1.0
        %v916 = vrcp.pop %v915
        %v917 = vmul.f32 %v915, %v916
        %v918 = vsub.f32 1.0, %v917
        %v919 = vmul.f32 %v916, %v918
        %v920 = vadd.f32 %v916, %v919
        %vm921 = vweird.f32 %v915
        %vm922 = vweird.f32 %v916
        %vm923 = vmor %vm921, %vm922
        %v924 = vsel %vm923, %v916, %v920
        %v925 = vand.u32 2147483647, %v915
        %vm926 = vcmp.eq.f32.partialorder %v925, 8.507059e+37
        %v927 = vand.u32 %v915, 2147483648
        %v928 = vor.u32 1.1754944e-38, %v927
        %v929 = vsel %vm926, %v928, %v924
        %v930 = vmul.f32 %v905, %v929
        %v931 = vmin.f32 %v930, 1.0
        %v932 = vmax.f32 %v931, -1.0
        %v933 = vmul.f32 %v566, %v566
        %v934 = vmin.f32 16.0, %v933
        %v935 = vmul.f32 %v934, 2.1237322e-06
        %v936 = vadd.f32 %v935, 0.00028619796
        %v937 = vmul.f32 %v934, %v936
        %v938 = vadd.f32 %v937, 0.0036580483
        %v939 = vmul.f32 %v934, %v938
        %v940 = vadd.f32 %v939, 0.05243302
        %v941 = vmul.f32 %v934, %v940
        %v942 = vadd.f32 %v941, 0.18741608
        %v943 = vmul.f32 %v934, %v942
        %v944 = vadd.f32 %v943, 1.1283791
        %v945 = vmul.f32 %v566, %v944
        %v946 = vmul.f32 %v934, 3.8918573e-05
        %v947 = vadd.f32 %v946, 0.001143296
        %v948 = vmul.f32 %v934, %v947
        %v949 = vadd.f32 %v948, 0.014752088
        %v950 = vmul.f32 %v934, %v949
        %v951 = vadd.f32 %v950, 0.112945676
        %v952 = vmul.f32 %v934, %v951
        %v953 = vadd.f32 %v952, 0.4994258
        %v954 = vmul.f32 %v934, %v953
        %v955 = vadd.f32 %v954, 1.0
        %v956 = vrcp.pop %v955
        %v957 = vmul.f32 %v955, %v956
        %v958 = vsub.f32 1.0, %v957
        %v959 = vmul.f32 %v956, %v958
        %v960 = vadd.f32 %v956, %v959
        %vm961 = vweird.f32 %v955
        %vm962 = vweird.f32 %v956
        %vm963 = vmor %vm961, %vm962
        %v964 = vsel %vm963, %v956, %v960
        %v965 = vand.u32 2147483647, %v955
        %vm966 = vcmp.eq.f32.partialorder %v965, 8.507059e+37
        %v967 = vand.u32 %v955, 2147483648
        %v968 = vor.u32 1.1754944e-38, %v967
        %v969 = vsel %vm966, %v968, %v964
        %v970 = vmul.f32 %v945, %v969
        %v971 = vmin.f32 %v970, 1.0
        %v972 = vmax.f32 %v971, -1.0
        %v973 = vmul.f32 %v567, %v567
        %v974 = vmin.f32 16.0, %v973
        %v975 = vmul.f32 %v974, 2.1237322e-06
        %v976 = vadd.f32 %v975, 0.00028619796
        %v977 = vmul.f32 %v974, %v976
        %v978 = vadd.f32 %v977, 0.0036580483
        %v979 = vmul.f32 %v974, %v978
        %v980 = vadd.f32 %v979, 0.05243302
        %v981 = vmul.f32 %v974, %v980
        %v982 = vadd.f32 %v981, 0.18741608
        %v983 = vmul.f32 %v974, %v982
        %v984 = vadd.f32 %v983, 1.1283791
        %v985 = vmul.f32 %v567, %v984
        %v986 = vmul.f32 %v974, 3.8918573e-05
        %v987 = vadd.f32 %v986, 0.001143296
        %v988 = vmul.f32 %v974, %v987
        %v989 = vadd.f32 %v988, 0.014752088
        %v990 = vmul.f32 %v974, %v989
        %v991 = vadd.f32 %v990, 0.112945676
        %v992 = vmul.f32 %v974, %v991
        %v993 = vadd.f32 %v992, 0.4994258
        %v994 = vmul.f32 %v974, %v993
        %v995 = vadd.f32 %v994, 1.0
        %v996 = vrcp.pop %v995
        %v997 = vmul.f32 %v995, %v996
        %v998 = vsub.f32 1.0, %v997
        %v999 = vmul.f32 %v996, %v998
        %v1000 = vadd.f32 %v996, %v999
        %vm1001 = vweird.f32 %v995
        %vm1002 = vweird.f32 %v996
        %vm1003 = vmor %vm1001, %vm1002
        %v1004 = vsel %vm1003, %v996, %v1000
        %v1005 = vand.u32 2147483647, %v995
        %vm1006 = vcmp.eq.f32.partialorder %v1005, 8.507059e+37
        %v1007 = vand.u32 %v995, 2147483648
        %v1008 = vor.u32 1.1754944e-38, %v1007
        %v1009 = vsel %vm1006, %v1008, %v1004
        %v1010 = vmul.f32 %v985, %v1009
        %v1011 = vmin.f32 %v1010, 1.0
        %v1012 = vmax.f32 %v1011, -1.0
        %v1013 = vmul.f32 %v568, %v568
        %v1014 = vmin.f32 16.0, %v1013
        %v1015 = vmul.f32 %v1014, 2.1237322e-06
        %v1016 = vadd.f32 %v1015, 0.00028619796
        %v1017 = vmul.f32 %v1014, %v1016
        %v1018 = vadd.f32 %v1017, 0.0036580483
        %v1019 = vmul.f32 %v1014, %v1018
        %v1020 = vadd.f32 %v1019, 0.05243302
        %v1021 = vmul.f32 %v1014, %v1020
        %v1022 = vadd.f32 %v1021, 0.18741608
        %v1023 = vmul.f32 %v1014, %v1022
        %v1024 = vadd.f32 %v1023, 1.1283791
        %v1025 = vmul.f32 %v568, %v1024
        %v1026 = vmul.f32 %v1014, 3.8918573e-05
        %v1027 = vadd.f32 %v1026, 0.001143296
        %v1028 = vmul.f32 %v1014, %v1027
        %v1029 = vadd.f32 %v1028, 0.014752088
        %v1030 = vmul.f32 %v1014, %v1029
        %v1031 = vadd.f32 %v1030, 0.112945676
        %v1032 = vmul.f32 %v1014, %v1031
        %v1033 = vadd.f32 %v1032, 0.4994258
        %v1034 = vmul.f32 %v1014, %v1033
        %v1035 = vadd.f32 %v1034, 1.0
        %v1036 = vrcp.pop %v1035
        %v1037 = vmul.f32 %v1035, %v1036
        %v1038 = vsub.f32 1.0, %v1037
        %v1039 = vmul.f32 %v1036, %v1038
        %v1040 = vadd.f32 %v1036, %v1039
        %vm1041 = vweird.f32 %v1035
        %vm1042 = vweird.f32 %v1036
        %vm1043 = vmor %vm1041, %vm1042
        %v1044 = vsel %vm1043, %v1036, %v1040
        %v1045 = vand.u32 2147483647, %v1035
        %vm1046 = vcmp.eq.f32.partialorder %v1045, 8.507059e+37
        %v1047 = vand.u32 %v1035, 2147483648
        %v1048 = vor.u32 1.1754944e-38, %v1047
        %v1049 = vsel %vm1046, %v1048, %v1044
        %v1050 = vmul.f32 %v1025, %v1049
        %v1051 = vmin.f32 %v1050, 1.0
        %v1052 = vmax.f32 %v1051, -1.0
        %v1053 = vmul.f32 %v569, %v569
        %v1054 = vmin.f32 16.0, %v1053
        %v1055 = vmul.f32 %v1054, 2.1237322e-06
        %v1056 = vadd.f32 %v1055, 0.00028619796
        %v1057 = vmul.f32 %v1054, %v1056
        %v1058 = vadd.f32 %v1057, 0.0036580483
        %v1059 = vmul.f32 %v1054, %v1058
        %v1060 = vadd.f32 %v1059, 0.05243302
        %v1061 = vmul.f32 %v1054, %v1060
        %v1062 = vadd.f32 %v1061, 0.18741608
        %v1063 = vmul.f32 %v1054, %v1062
        %v1064 = vadd.f32 %v1063, 1.1283791
        %v1065 = vmul.f32 %v569, %v1064
        %v1066 = vmul.f32 %v1054, 3.8918573e-05
        %v1067 = vadd.f32 %v1066, 0.001143296
        %v1068 = vmul.f32 %v1054, %v1067
        %v1069 = vadd.f32 %v1068, 0.014752088
        %v1070 = vmul.f32 %v1054, %v1069
        %v1071 = vadd.f32 %v1070, 0.112945676
        %v1072 = vmul.f32 %v1054, %v1071
        %v1073 = vadd.f32 %v1072, 0.4994258
        %v1074 = vmul.f32 %v1054, %v1073
        %v1075 = vadd.f32 %v1074, 1.0
        %v1076 = vrcp.pop %v1075
        %v1077 = vmul.f32 %v1075, %v1076
        %v1078 = vsub.f32 1.0, %v1077
        %v1079 = vmul.f32 %v1076, %v1078
        %v1080 = vadd.f32 %v1076, %v1079
        %vm1081 = vweird.f32 %v1075
        %vm1082 = vweird.f32 %v1076
        %vm1083 = vmor %vm1081, %vm1082
        %v1084 = vsel %vm1083, %v1076, %v1080
        %v1085 = vand.u32 2147483647, %v1075
        %vm1086 = vcmp.eq.f32.partialorder %v1085, 8.507059e+37
        %v1087 = vand.u32 %v1075, 2147483648
        %v1088 = vor.u32 1.1754944e-38, %v1087
        %v1089 = vsel %vm1086, %v1088, %v1084
        %v1090 = vmul.f32 %v1065, %v1089
        %v1091 = vmin.f32 %v1090, 1.0
        %v1092 = vmax.f32 %v1091, -1.0
        %v1093 = vmul.f32 %v570, %v570
        %v1094 = vmin.f32 16.0, %v1093
        %v1095 = vmul.f32 %v1094, 2.1237322e-06
        %v1096 = vadd.f32 %v1095, 0.00028619796
        %v1097 = vmul.f32 %v1094, %v1096
        %v1098 = vadd.f32 %v1097, 0.0036580483
        %v1099 = vmul.f32 %v1094, %v1098
        %v1100 = vadd.f32 %v1099, 0.05243302
        %v1101 = vmul.f32 %v1094, %v1100
        %v1102 = vadd.f32 %v1101, 0.18741608
        %v1103 = vmul.f32 %v1094, %v1102
        %v1104 = vadd.f32 %v1103, 1.1283791
        %v1105 = vmul.f32 %v570, %v1104
        %v1106 = vmul.f32 %v1094, 3.8918573e-05
        %v1107 = vadd.f32 %v1106, 0.001143296
        %v1108 = vmul.f32 %v1094, %v1107
        %v1109 = vadd.f32 %v1108, 0.014752088
        %v1110 = vmul.f32 %v1094, %v1109
        %v1111 = vadd.f32 %v1110, 0.112945676
        %v1112 = vmul.f32 %v1094, %v1111
        %v1113 = vadd.f32 %v1112, 0.4994258
        %v1114 = vmul.f32 %v1094, %v1113
        %v1115 = vadd.f32 %v1114, 1.0
        %v1116 = vrcp.pop %v1115
        %v1117 = vmul.f32 %v1115, %v1116
        %v1118 = vsub.f32 1.0, %v1117
        %v1119 = vmul.f32 %v1116, %v1118
        %v1120 = vadd.f32 %v1116, %v1119
        %vm1121 = vweird.f32 %v1115
        %vm1122 = vweird.f32 %v1116
        %vm1123 = vmor %vm1121, %vm1122
        %v1124 = vsel %vm1123, %v1116, %v1120
        %v1125 = vand.u32 2147483647, %v1115
        %vm1126 = vcmp.eq.f32.partialorder %v1125, 8.507059e+37
        %v1127 = vand.u32 %v1115, 2147483648
        %v1128 = vor.u32 1.1754944e-38, %v1127
        %v1129 = vsel %vm1126, %v1128, %v1124
        %v1130 = vmul.f32 %v1105, %v1129
        %v1131 = vmin.f32 %v1130, 1.0
        %v1132 = vmax.f32 %v1131, -1.0
        %v1133 = vmul.f32 %v571, %v571
        %v1134 = vmin.f32 16.0, %v1133
        %v1135 = vmul.f32 %v1134, 2.1237322e-06
        %v1136 = vadd.f32 %v1135, 0.00028619796
        %v1137 = vmul.f32 %v1134, %v1136
        %v1138 = vadd.f32 %v1137, 0.0036580483
        %v1139 = vmul.f32 %v1134, %v1138
        %v1140 = vadd.f32 %v1139, 0.05243302
        %v1141 = vmul.f32 %v1134, %v1140
        %v1142 = vadd.f32 %v1141, 0.18741608
        %v1143 = vmul.f32 %v1134, %v1142
        %v1144 = vadd.f32 %v1143, 1.1283791
        %v1145 = vmul.f32 %v571, %v1144
        %v1146 = vmul.f32 %v1134, 3.8918573e-05
        %v1147 = vadd.f32 %v1146, 0.001143296
        %v1148 = vmul.f32 %v1134, %v1147
        %v1149 = vadd.f32 %v1148, 0.014752088
        %v1150 = vmul.f32 %v1134, %v1149
        %v1151 = vadd.f32 %v1150, 0.112945676
        %v1152 = vmul.f32 %v1134, %v1151
        %v1153 = vadd.f32 %v1152, 0.4994258
        %v1154 = vmul.f32 %v1134, %v1153
        %v1155 = vadd.f32 %v1154, 1.0
        %v1156 = vrcp.pop %v1155
        %v1157 = vmul.f32 %v1155, %v1156
        %v1158 = vsub.f32 1.0, %v1157
        %v1159 = vmul.f32 %v1156, %v1158
        %v1160 = vadd.f32 %v1156, %v1159
        %vm1161 = vweird.f32 %v1155
        %vm1162 = vweird.f32 %v1156
        %vm1163 = vmor %vm1161, %vm1162
        %v1164 = vsel %vm1163, %v1156, %v1160
        %v1165 = vand.u32 2147483647, %v1155
        %vm1166 = vcmp.eq.f32.partialorder %v1165, 8.507059e+37
        %v1167 = vand.u32 %v1155, 2147483648
        %v1168 = vor.u32 1.1754944e-38, %v1167
        %v1169 = vsel %vm1166, %v1168, %v1164
        %v1170 = vmul.f32 %v1145, %v1169
        %v1171 = vmin.f32 %v1170, 1.0
        %v1172 = vmax.f32 %v1171, -1.0
        %v1173 = vmul.f32 %v572, %v572
        %v1174 = vmin.f32 16.0, %v1173
        %v1175 = vmul.f32 %v1174, 2.1237322e-06
        %v1176 = vadd.f32 %v1175, 0.00028619796
        %v1177 = vmul.f32 %v1174, %v1176
        %v1178 = vadd.f32 %v1177, 0.0036580483
        %v1179 = vmul.f32 %v1174, %v1178
        %v1180 = vadd.f32 %v1179, 0.05243302
        %v1181 = vmul.f32 %v1174, %v1180
        %v1182 = vadd.f32 %v1181, 0.18741608
        %v1183 = vmul.f32 %v1174, %v1182
        %v1184 = vadd.f32 %v1183, 1.1283791
        %v1185 = vmul.f32 %v572, %v1184
        %v1186 = vmul.f32 %v1174, 3.8918573e-05
        %v1187 = vadd.f32 %v1186, 0.001143296
        %v1188 = vmul.f32 %v1174, %v1187
        %v1189 = vadd.f32 %v1188, 0.014752088
        %v1190 = vmul.f32 %v1174, %v1189
        %v1191 = vadd.f32 %v1190, 0.112945676
        %v1192 = vmul.f32 %v1174, %v1191
        %v1193 = vadd.f32 %v1192, 0.4994258
        %v1194 = vmul.f32 %v1174, %v1193
        %v1195 = vadd.f32 %v1194, 1.0
        %v1196 = vrcp.pop %v1195
        %v1197 = vmul.f32 %v1195, %v1196
        %v1198 = vsub.f32 1.0, %v1197
        %v1199 = vmul.f32 %v1196, %v1198
        %v1200 = vadd.f32 %v1196, %v1199
        %vm1201 = vweird.f32 %v1195
        %vm1202 = vweird.f32 %v1196
        %vm1203 = vmor %vm1201, %vm1202
        %v1204 = vsel %vm1203, %v1196, %v1200
        %v1205 = vand.u32 2147483647, %v1195
        %vm1206 = vcmp.eq.f32.partialorder %v1205, 8.507059e+37
        %v1207 = vand.u32 %v1195, 2147483648
        %v1208 = vor.u32 1.1754944e-38, %v1207
        %v1209 = vsel %vm1206, %v1208, %v1204
        %v1210 = vmul.f32 %v1185, %v1209
        %v1211 = vmin.f32 %v1210, 1.0
        %v1212 = vmax.f32 %v1211, -1.0
        %v1213 = vadd.f32 %v612, 1.0
        %v1214 = vadd.f32 %v652, 1.0
        %v1215 = vadd.f32 %v692, 1.0
        %v1216 = vadd.f32 %v732, 1.0
        %v1217 = vadd.f32 %v772, 1.0
        %v1218 = vadd.f32 %v812, 1.0
        %v1219 = vadd.f32 %v852, 1.0
        %v1220 = vadd.f32 %v892, 1.0
        %v1221 = vadd.f32 %v932, 1.0
        %v1222 = vadd.f32 %v972, 1.0
        %v1223 = vadd.f32 %v1012, 1.0
        %v1224 = vadd.f32 %v1052, 1.0
        %v1225 = vadd.f32 %v1092, 1.0
        %v1226 = vadd.f32 %v1132, 1.0
        %v1227 = vadd.f32 %v1172, 1.0
        %v1228 = vadd.f32 %v1212, 1.0
        %v1229 = vmul.f32 %v541, %v1213
        %v1230 = vmul.f32 %v542, %v1214
        %v1231 = vmul.f32 %v543, %v1215
        %v1232 = vmul.f32 %v544, %v1216
        %v1233 = vmul.f32 %v545, %v1217
        %v1234 = vmul.f32 %v546, %v1218
        %v1235 = vmul.f32 %v547, %v1219
        %v1236 = vmul.f32 %v548, %v1220
        %v1237 = vmul.f32 %v549, %v1221
        %v1238 = vmul.f32 %v550, %v1222
        %v1239 = vmul.f32 %v551, %v1223
        %v1240 = vmul.f32 %v552, %v1224
        %v1241 = vmul.f32 %v553, %v1225
        %v1242 = vmul.f32 %v554, %v1226
        %v1243 = vmul.f32 %v555, %v1227
        %v1244 = vmul.f32 %v556, %v1228
        %v1261 = vrot.slane %v1229, 4
        %v1262 = vrot.slane %v1230, 4
        %v1263 = vrot.slane %v1231, 4
        %v1264 = vrot.slane %v1232, 4
        %v1265 = vrot.slane %v1233, 4
        %v1266 = vrot.slane %v1234, 4
        %v1267 = vrot.slane %v1235, 4
        %v1268 = vrot.slane %v1236, 4
        %v1269 = vrot.slane %v1237, 4
        %v1270 = vrot.slane %v1238, 4
        %v1271 = vrot.slane %v1239, 4
        %v1272 = vrot.slane %v1240, 4
        %v1273 = vrot.slane %v1241, 4
        %v1274 = vrot.slane %v1242, 4
        %v1275 = vrot.slane %v1243, 4
        %v1276 = vrot.slane %v1244, 4
        %vm1293 = vcmask 1043456
        %v1294 = vsel %vm1293, %v1229, -inf
        %v1295 = vrot.slane %v1294, 4
        %v1296 = vmax.f32 %v1294, %v1295
        %v1297 = vrot.slane %v1296, 2
        %v1298 = vmax.f32 %v1296, %v1297
        %v1299 = vrot.slane %v1298, 1
        %v1300 = vmax.f32 %v1298, %v1299
        %v1301 = vsel %vm1293, %v1261, -inf
        %v1302 = vrot.slane %v1301, 4
        %v1303 = vmax.f32 %v1301, %v1302
        %v1304 = vrot.slane %v1303, 2
        %v1305 = vmax.f32 %v1303, %v1304
        %v1306 = vrot.slane %v1305, 1
        %v1307 = vmax.f32 %v1305, %v1306
        %v1308 = vsel %vm1293, %v1230, -inf
        %v1309 = vrot.slane %v1308, 4
        %v1310 = vmax.f32 %v1308, %v1309
        %v1311 = vrot.slane %v1310, 2
        %v1312 = vmax.f32 %v1310, %v1311
        %v1313 = vrot.slane %v1312, 1
        %v1314 = vmax.f32 %v1312, %v1313
        %v1315 = vsel %vm1293, %v1262, -inf
        %v1316 = vrot.slane %v1315, 4
        %v1317 = vmax.f32 %v1315, %v1316
        %v1318 = vrot.slane %v1317, 2
        %v1319 = vmax.f32 %v1317, %v1318
        %v1320 = vrot.slane %v1319, 1
        %v1321 = vmax.f32 %v1319, %v1320
        %v1322 = vsel %vm1293, %v1231, -inf
        %v1323 = vrot.slane %v1322, 4
        %v1324 = vmax.f32 %v1322, %v1323
        %v1325 = vrot.slane %v1324, 2
        %v1326 = vmax.f32 %v1324, %v1325
        %v1327 = vrot.slane %v1326, 1
        %v1328 = vmax.f32 %v1326, %v1327
        %v1329 = vsel %vm1293, %v1263, -inf
        %v1330 = vrot.slane %v1329, 4
        %v1331 = vmax.f32 %v1329, %v1330
        %v1332 = vrot.slane %v1331, 2
        %v1333 = vmax.f32 %v1331, %v1332
        %v1334 = vrot.slane %v1333, 1
        %v1335 = vmax.f32 %v1333, %v1334
        %v1336 = vsel %vm1293, %v1232, -inf
        %v1337 = vrot.slane %v1336, 4
        %v1338 = vmax.f32 %v1336, %v1337
        %v1339 = vrot.slane %v1338, 2
        %v1340 = vmax.f32 %v1338, %v1339
        %v1341 = vrot.slane %v1340, 1
        %v1342 = vmax.f32 %v1340, %v1341
        %v1343 = vsel %vm1293, %v1264, -inf
        %v1344 = vrot.slane %v1343, 4
        %v1345 = vmax.f32 %v1343, %v1344
        %v1346 = vrot.slane %v1345, 2
        %v1347 = vmax.f32 %v1345, %v1346
        %v1348 = vrot.slane %v1347, 1
        %v1349 = vmax.f32 %v1347, %v1348
        %v1350 = vsel %vm1293, %v1233, -inf
        %v1351 = vrot.slane %v1350, 4
        %v1352 = vmax.f32 %v1350, %v1351
        %v1353 = vrot.slane %v1352, 2
        %v1354 = vmax.f32 %v1352, %v1353
        %v1355 = vrot.slane %v1354, 1
        %v1356 = vmax.f32 %v1354, %v1355
        %v1357 = vsel %vm1293, %v1265, -inf
        %v1358 = vrot.slane %v1357, 4
        %v1359 = vmax.f32 %v1357, %v1358
        %v1360 = vrot.slane %v1359, 2
        %v1361 = vmax.f32 %v1359, %v1360
        %v1362 = vrot.slane %v1361, 1
        %v1363 = vmax.f32 %v1361, %v1362
        %v1364 = vsel %vm1293, %v1234, -inf
        %v1365 = vrot.slane %v1364, 4
        %v1366 = vmax.f32 %v1364, %v1365
        %v1367 = vrot.slane %v1366, 2
        %v1368 = vmax.f32 %v1366, %v1367
        %v1369 = vrot.slane %v1368, 1
        %v1370 = vmax.f32 %v1368, %v1369
        %v1371 = vsel %vm1293, %v1266, -inf
        %v1372 = vrot.slane %v1371, 4
        %v1373 = vmax.f32 %v1371, %v1372
        %v1374 = vrot.slane %v1373, 2
        %v1375 = vmax.f32 %v1373, %v1374
        %v1376 = vrot.slane %v1375, 1
        %v1377 = vmax.f32 %v1375, %v1376
        %v1378 = vsel %vm1293, %v1235, -inf
        %v1379 = vrot.slane %v1378, 4
        %v1380 = vmax.f32 %v1378, %v1379
        %v1381 = vrot.slane %v1380, 2
        %v1382 = vmax.f32 %v1380, %v1381
        %v1383 = vrot.slane %v1382, 1
        %v1384 = vmax.f32 %v1382, %v1383
        %v1385 = vsel %vm1293, %v1267, -inf
        %v1386 = vrot.slane %v1385, 4
        %v1387 = vmax.f32 %v1385, %v1386
        %v1388 = vrot.slane %v1387, 2
        %v1389 = vmax.f32 %v1387, %v1388
        %v1390 = vrot.slane %v1389, 1
        %v1391 = vmax.f32 %v1389, %v1390
        %v1392 = vsel %vm1293, %v1236, -inf
        %v1393 = vrot.slane %v1392, 4
        %v1394 = vmax.f32 %v1392, %v1393
        %v1395 = vrot.slane %v1394, 2
        %v1396 = vmax.f32 %v1394, %v1395
        %v1397 = vrot.slane %v1396, 1
        %v1398 = vmax.f32 %v1396, %v1397
        %v1399 = vsel %vm1293, %v1268, -inf
        %v1400 = vrot.slane %v1399, 4
        %v1401 = vmax.f32 %v1399, %v1400
        %v1402 = vrot.slane %v1401, 2
        %v1403 = vmax.f32 %v1401, %v1402
        %v1404 = vrot.slane %v1403, 1
        %v1405 = vmax.f32 %v1403, %v1404
        %v1406 = vsel %vm1293, %v1237, -inf
        %v1407 = vrot.slane %v1406, 4
        %v1408 = vmax.f32 %v1406, %v1407
        %v1409 = vrot.slane %v1408, 2
        %v1410 = vmax.f32 %v1408, %v1409
        %v1411 = vrot.slane %v1410, 1
        %v1412 = vmax.f32 %v1410, %v1411
        %v1413 = vsel %vm1293, %v1269, -inf
        %v1414 = vrot.slane %v1413, 4
        %v1415 = vmax.f32 %v1413, %v1414
        %v1416 = vrot.slane %v1415, 2
        %v1417 = vmax.f32 %v1415, %v1416
        %v1418 = vrot.slane %v1417, 1
        %v1419 = vmax.f32 %v1417, %v1418
        %v1420 = vsel %vm1293, %v1238, -inf
        %v1421 = vrot.slane %v1420, 4
        %v1422 = vmax.f32 %v1420, %v1421
        %v1423 = vrot.slane %v1422, 2
        %v1424 = vmax.f32 %v1422, %v1423
        %v1425 = vrot.slane %v1424, 1
        %v1426 = vmax.f32 %v1424, %v1425
        %v1427 = vsel %vm1293, %v1270, -inf
        %v1428 = vrot.slane %v1427, 4
        %v1429 = vmax.f32 %v1427, %v1428
        %v1430 = vrot.slane %v1429, 2
        %v1431 = vmax.f32 %v1429, %v1430
        %v1432 = vrot.slane %v1431, 1
        %v1433 = vmax.f32 %v1431, %v1432
        %v1434 = vsel %vm1293, %v1239, -inf
        %v1435 = vrot.slane %v1434, 4
        %v1436 = vmax.f32 %v1434, %v1435
        %v1437 = vrot.slane %v1436, 2
        %v1438 = vmax.f32 %v1436, %v1437
        %v1439 = vrot.slane %v1438, 1
        %v1440 = vmax.f32 %v1438, %v1439
        %v1441 = vsel %vm1293, %v1271, -inf
        %v1442 = vrot.slane %v1441, 4
        %v1443 = vmax.f32 %v1441, %v1442
        %v1444 = vrot.slane %v1443, 2
        %v1445 = vmax.f32 %v1443, %v1444
        %v1446 = vrot.slane %v1445, 1
        %v1447 = vmax.f32 %v1445, %v1446
        %v1448 = vsel %vm1293, %v1240, -inf
        %v1449 = vrot.slane %v1448, 4
        %v1450 = vmax.f32 %v1448, %v1449
        %v1451 = vrot.slane %v1450, 2
        %v1452 = vmax.f32 %v1450, %v1451
        %v1453 = vrot.slane %v1452, 1
        %v1454 = vmax.f32 %v1452, %v1453
        %v1455 = vsel %vm1293, %v1272, -inf
        %v1456 = vrot.slane %v1455, 4
        %v1457 = vmax.f32 %v1455, %v1456
        %v1458 = vrot.slane %v1457, 2
        %v1459 = vmax.f32 %v1457, %v1458
        %v1460 = vrot.slane %v1459, 1
        %v1461 = vmax.f32 %v1459, %v1460
        %v1462 = vsel %vm1293, %v1241, -inf
        %v1463 = vrot.slane %v1462, 4
        %v1464 = vmax.f32 %v1462, %v1463
        %v1465 = vrot.slane %v1464, 2
        %v1466 = vmax.f32 %v1464, %v1465
        %v1467 = vrot.slane %v1466, 1
        %v1468 = vmax.f32 %v1466, %v1467
        %v1469 = vsel %vm1293, %v1273, -inf
        %v1470 = vrot.slane %v1469, 4
        %v1471 = vmax.f32 %v1469, %v1470
        %v1472 = vrot.slane %v1471, 2
        %v1473 = vmax.f32 %v1471, %v1472
        %v1474 = vrot.slane %v1473, 1
        %v1475 = vmax.f32 %v1473, %v1474
        %v1476 = vsel %vm1293, %v1242, -inf
        %v1477 = vrot.slane %v1476, 4
        %v1478 = vmax.f32 %v1476, %v1477
        %v1479 = vrot.slane %v1478, 2
        %v1480 = vmax.f32 %v1478, %v1479
        %v1481 = vrot.slane %v1480, 1
        %v1482 = vmax.f32 %v1480, %v1481
        %v1483 = vsel %vm1293, %v1274, -inf
        %v1484 = vrot.slane %v1483, 4
        %v1485 = vmax.f32 %v1483, %v1484
        %v1486 = vrot.slane %v1485, 2
        %v1487 = vmax.f32 %v1485, %v1486
        %v1488 = vrot.slane %v1487, 1
        %v1489 = vmax.f32 %v1487, %v1488
        %v1490 = vsel %vm1293, %v1243, -inf
        %v1491 = vrot.slane %v1490, 4
        %v1492 = vmax.f32 %v1490, %v1491
        %v1493 = vrot.slane %v1492, 2
        %v1494 = vmax.f32 %v1492, %v1493
        %v1495 = vrot.slane %v1494, 1
        %v1496 = vmax.f32 %v1494, %v1495
        %v1497 = vsel %vm1293, %v1275, -inf
        %v1498 = vrot.slane %v1497, 4
        %v1499 = vmax.f32 %v1497, %v1498
        %v1500 = vrot.slane %v1499, 2
        %v1501 = vmax.f32 %v1499, %v1500
        %v1502 = vrot.slane %v1501, 1
        %v1503 = vmax.f32 %v1501, %v1502
        %v1504 = vsel %vm1293, %v1244, -inf
        %v1505 = vrot.slane %v1504, 4
        %v1506 = vmax.f32 %v1504, %v1505
        %v1507 = vrot.slane %v1506, 2
        %v1508 = vmax.f32 %v1506, %v1507
        %v1509 = vrot.slane %v1508, 1
        %v1510 = vmax.f32 %v1508, %v1509
        %v1511 = vsel %vm1293, %v1276, -inf
        %v1512 = vrot.slane %v1511, 4
        %v1513 = vmax.f32 %v1511, %v1512
        %v1514 = vrot.slane %v1513, 2
        %v1515 = vmax.f32 %v1513, %v1514
        %v1516 = vrot.slane %v1515, 1
        %v1517 = vmax.f32 %v1515, %v1516
        %v1518 = vld [vmem:[#allocation2] sm:$0xff]
        %v1519 = vld [vmem:[#allocation2 + $0x8] sm:$0xff]
        %v1520 = vld [vmem:[#allocation2 + $0x10] sm:$0xff]
        %v1521 = vld [vmem:[#allocation2 + $0x18] sm:$0xff]
        %v1522 = vld [vmem:[#allocation2 + $0x20] sm:$0xff]
        %v1523 = vld [vmem:[#allocation2 + $0x28] sm:$0xff]
        %v1524 = vld [vmem:[#allocation2 + $0x30] sm:$0xff]
        %v1525 = vld [vmem:[#allocation2 + $0x38] sm:$0xff]
        %v1526 = vld [vmem:[#allocation2 + $0x40] sm:$0xff]
        %v1527 = vld [vmem:[#allocation2 + $0x48] sm:$0xff]
        %v1528 = vld [vmem:[#allocation2 + $0x50] sm:$0xff]
        %v1529 = vld [vmem:[#allocation2 + $0x58] sm:$0xff]
        %v1530 = vld [vmem:[#allocation2 + $0x60] sm:$0xff]
        %v1531 = vld [vmem:[#allocation2 + $0x68] sm:$0xff]
        %v1532 = vld [vmem:[#allocation2 + $0x70] sm:$0xff]
        %v1533 = vld [vmem:[#allocation2 + $0x78] sm:$0xff]
        %v1534 = vld [vmem:[#allocation2 + $0x80] sm:$0xff]
        %v1535 = vld [vmem:[#allocation2 + $0x88] sm:$0xff]
        %v1536 = vld [vmem:[#allocation2 + $0x90] sm:$0xff]
        %v1537 = vld [vmem:[#allocation2 + $0x98] sm:$0xff]
        %v1538 = vld [vmem:[#allocation2 + $0xa0] sm:$0xff]
        %v1539 = vld [vmem:[#allocation2 + $0xa8] sm:$0xff]
        %v1540 = vld [vmem:[#allocation2 + $0xb0] sm:$0xff]
        %v1541 = vld [vmem:[#allocation2 + $0xb8] sm:$0xff]
        %v1542 = vld [vmem:[#allocation2 + $0xc0] sm:$0xff]
        %v1543 = vld [vmem:[#allocation2 + $0xc8] sm:$0xff]
        %v1544 = vld [vmem:[#allocation2 + $0xd0] sm:$0xff]
        %v1545 = vld [vmem:[#allocation2 + $0xd8] sm:$0xff]
        %v1546 = vld [vmem:[#allocation2 + $0xe0] sm:$0xff]
        %v1547 = vld [vmem:[#allocation2 + $0xe8] sm:$0xff]
        %v1548 = vld [vmem:[#allocation2 + $0xf0] sm:$0xff]
        %v1549 = vld [vmem:[#allocation2 + $0xf8] sm:$0xff]
        %v1550 = vld [vmem:[%s4] sm:$0x3]
        %v1552 = vperm.slane %v1550, 0
        %v1553 = vperm.slane %v1550, 1
        %vm1588 = vcmask 1041409
        %v1589 = vsel %vm1588, %v1307, %v1300
        %vm1590 = vcmask 1042434
        %v1591 = vsel %vm1590, %v1314, %v1589
        %vm1592 = vcmask 1043459
        %v1593 = vsel %vm1592, %v1321, %v1591
        %vm1594 = vcmask 1044484
        %v1595 = vsel %vm1594, %v1328, %v1593
        %vm1596 = vcmask 1045509
        %v1597 = vsel %vm1596, %v1335, %v1595
        %vm1598 = vcmask 1046534
        %v1599 = vsel %vm1598, %v1342, %v1597
        %vm1600 = vcmask 1047559
        %v1601 = vsel %vm1600, %v1349, %v1599
        %v1602 = vsel %vm1588, %v1363, %v1356
        %v1603 = vsel %vm1590, %v1370, %v1602
        %v1604 = vsel %vm1592, %v1377, %v1603
        %v1605 = vsel %vm1594, %v1384, %v1604
        %v1606 = vsel %vm1596, %v1391, %v1605
        %v1607 = vsel %vm1598, %v1398, %v1606
        %v1608 = vsel %vm1600, %v1405, %v1607
        %v1609 = vsel %vm1588, %v1419, %v1412
        %v1610 = vsel %vm1590, %v1426, %v1609
        %v1611 = vsel %vm1592, %v1433, %v1610
        %v1612 = vsel %vm1594, %v1440, %v1611
        %v1613 = vsel %vm1596, %v1447, %v1612
        %v1614 = vsel %vm1598, %v1454, %v1613
        %v1615 = vsel %vm1600, %v1461, %v1614
        %v1616 = vsel %vm1588, %v1475, %v1468
        %v1617 = vsel %vm1590, %v1482, %v1616
        %v1618 = vsel %vm1592, %v1489, %v1617
        %v1619 = vsel %vm1594, %v1496, %v1618
        %v1620 = vsel %vm1596, %v1503, %v1619
        %v1621 = vsel %vm1598, %v1510, %v1620
        %v1622 = vsel %vm1600, %v1517, %v1621
        %1627 = vmatpush.msra.mxu0 %v1548
        %1628 = vmatpush.msra.mxu0 %v1546
        %1629 = vmatpush.msra.mxu0 %v1544
        %1630 = vmatpush.msra.mxu0 %v1542
        %1631 = vmatpush.msra.mxu0 %v1540
        %1632 = vmatpush.msra.mxu0 %v1538
        %1633 = vmatpush.msra.mxu0 %v1536
        %1634 = vmatpush.msra.mxu0 %v1534
        %1635 = vmatpush.msra.mxu0 %v1532
        %1636 = vmatpush.msra.mxu0 %v1530
        %1637 = vmatpush.msra.mxu0 %v1528
        %1638 = vmatpush.msra.mxu0 %v1526
        %1639 = vmatpush.msra.mxu0 %v1524
        %1640 = vmatpush.msra.mxu0 %v1522
        %1641 = vmatpush.msra.mxu0 %v1520
        %1642 = vmatpush.msra.mxu0 %v1518
        %1643 = vmatmul.f32.gmra.mxu0 %v1601
        %v1644 = vpop.f32.mrf.mxu0
        %v1645 = vadd.f32 %v1552, %v1644
        %1646 = vmatmul.f32.gmra.mxu0 %v1608
        %v1647 = vpop.f32.mrf.mxu0
        %v1648 = vadd.f32 %v1552, %v1647
        %1649 = vmatmul.f32.gmra.mxu0 %v1615
        %v1650 = vpop.f32.mrf.mxu0
        %v1651 = vadd.f32 %v1552, %v1650
        %1652 = vmatmul.f32.gmra.mxu0 %v1622
        %v1653 = vpop.f32.mrf.mxu0
        %v1654 = vadd.f32 %v1552, %v1653
        %1655 = vdwg.mxu0
        %1656 = vmatpush.msra.mxu0 %v1549
        %1657 = vmatpush.msra.mxu0 %v1547
        %1658 = vmatpush.msra.mxu0 %v1545
        %1659 = vmatpush.msra.mxu0 %v1543
        %1660 = vmatpush.msra.mxu0 %v1541
        %1661 = vmatpush.msra.mxu0 %v1539
        %1662 = vmatpush.msra.mxu0 %v1537
        %1663 = vmatpush.msra.mxu0 %v1535
        %1664 = vmatpush.msra.mxu0 %v1533
        %1665 = vmatpush.msra.mxu0 %v1531
        %1666 = vmatpush.msra.mxu0 %v1529
        %1667 = vmatpush.msra.mxu0 %v1527
        %1668 = vmatpush.msra.mxu0 %v1525
        %1669 = vmatpush.msra.mxu0 %v1523
        %1670 = vmatpush.msra.mxu0 %v1521
        %1671 = vmatpush.msra.mxu0 %v1519
        %1672 = vmatmul.f32.gmra.mxu0 %v1601
        %v1673 = vpop.f32.mrf.mxu0
        %v1674 = vadd.f32 %v1553, %v1673
        %1675 = vmatmul.f32.gmra.mxu0 %v1608
        %v1676 = vpop.f32.mrf.mxu0
        %v1677 = vadd.f32 %v1553, %v1676
        %1678 = vmatmul.f32.gmra.mxu0 %v1615
        %v1679 = vpop.f32.mrf.mxu0
        %v1680 = vadd.f32 %v1553, %v1679
        %1681 = vmatmul.f32.gmra.mxu0 %v1622
        %v1682 = vpop.f32.mrf.mxu0
        %v1683 = vadd.f32 %v1553, %v1682
        %1684 = vdwg.mxu0
        %v1685 = vmul.f32 %v1645, 0.5
        %v1686 = vmul.f32 %v1674, 0.5
        %v1687 = vmul.f32 %v1648, 0.5
        %v1688 = vmul.f32 %v1677, 0.5
        %v1689 = vmul.f32 %v1651, 0.5
        %v1690 = vmul.f32 %v1680, 0.5
        %v1691 = vmul.f32 %v1654, 0.5
        %v1692 = vmul.f32 %v1683, 0.5
        %v1693 = vmul.f32 %v1645, 0.70710677
        %v1694 = vmul.f32 %v1674, 0.70710677
        %v1695 = vmul.f32 %v1648, 0.70710677
        %v1696 = vmul.f32 %v1677, 0.70710677
        %v1697 = vmul.f32 %v1651, 0.70710677
        %v1698 = vmul.f32 %v1680, 0.70710677
        %v1699 = vmul.f32 %v1654, 0.70710677
        %v1700 = vmul.f32 %v1683, 0.70710677
        %v1701 = vmul.f32 %v1693, %v1693
        %v1702 = vmin.f32 16.0, %v1701
        %v1703 = vmul.f32 %v1702, 2.1237322e-06
        %v1704 = vadd.f32 %v1703, 0.00028619796
        %v1705 = vmul.f32 %v1702, %v1704
        %v1706 = vadd.f32 %v1705, 0.0036580483
        %v1707 = vmul.f32 %v1702, %v1706
        %v1708 = vadd.f32 %v1707, 0.05243302
        %v1709 = vmul.f32 %v1702, %v1708
        %v1710 = vadd.f32 %v1709, 0.18741608
        %v1711 = vmul.f32 %v1702, %v1710
        %v1712 = vadd.f32 %v1711, 1.1283791
        %v1713 = vmul.f32 %v1693, %v1712
        %v1714 = vmul.f32 %v1702, 3.8918573e-05
        %v1715 = vadd.f32 %v1714, 0.001143296
        %v1716 = vmul.f32 %v1702, %v1715
        %v1717 = vadd.f32 %v1716, 0.014752088
        %v1718 = vmul.f32 %v1702, %v1717
        %v1719 = vadd.f32 %v1718, 0.112945676
        %v1720 = vmul.f32 %v1702, %v1719
        %v1721 = vadd.f32 %v1720, 0.4994258
        %v1722 = vmul.f32 %v1702, %v1721
        %v1723 = vadd.f32 %v1722, 1.0
        %v1724 = vrcp.pop %v1723
        %v1725 = vmul.f32 %v1723, %v1724
        %v1726 = vsub.f32 1.0, %v1725
        %v1727 = vmul.f32 %v1724, %v1726
        %v1728 = vadd.f32 %v1724, %v1727
        %vm1729 = vweird.f32 %v1723
        %vm1730 = vweird.f32 %v1724
        %vm1731 = vmor %vm1729, %vm1730
        %v1732 = vsel %vm1731, %v1724, %v1728
        %v1733 = vand.u32 2147483647, %v1723
        %vm1734 = vcmp.eq.f32.partialorder %v1733, 8.507059e+37
        %v1735 = vand.u32 %v1723, 2147483648
        %v1736 = vor.u32 1.1754944e-38, %v1735
        %v1737 = vsel %vm1734, %v1736, %v1732
        %v1738 = vmul.f32 %v1713, %v1737
        %v1739 = vmin.f32 %v1738, 1.0
        %v1740 = vmax.f32 %v1739, -1.0
        %v1741 = vmul.f32 %v1694, %v1694
        %v1742 = vmin.f32 16.0, %v1741
        %v1743 = vmul.f32 %v1742, 2.1237322e-06
        %v1744 = vadd.f32 %v1743, 0.00028619796
        %v1745 = vmul.f32 %v1742, %v1744
        %v1746 = vadd.f32 %v1745, 0.0036580483
        %v1747 = vmul.f32 %v1742, %v1746
        %v1748 = vadd.f32 %v1747, 0.05243302
        %v1749 = vmul.f32 %v1742, %v1748
        %v1750 = vadd.f32 %v1749, 0.18741608
        %v1751 = vmul.f32 %v1742, %v1750
        %v1752 = vadd.f32 %v1751, 1.1283791
        %v1753 = vmul.f32 %v1694, %v1752
        %v1754 = vmul.f32 %v1742, 3.8918573e-05
        %v1755 = vadd.f32 %v1754, 0.001143296
        %v1756 = vmul.f32 %v1742, %v1755
        %v1757 = vadd.f32 %v1756, 0.014752088
        %v1758 = vmul.f32 %v1742, %v1757
        %v1759 = vadd.f32 %v1758, 0.112945676
        %v1760 = vmul.f32 %v1742, %v1759
        %v1761 = vadd.f32 %v1760, 0.4994258
        %v1762 = vmul.f32 %v1742, %v1761
        %v1763 = vadd.f32 %v1762, 1.0
        %v1764 = vrcp.pop %v1763
        %v1765 = vmul.f32 %v1763, %v1764
        %v1766 = vsub.f32 1.0, %v1765
        %v1767 = vmul.f32 %v1764, %v1766
        %v1768 = vadd.f32 %v1764, %v1767
        %vm1769 = vweird.f32 %v1763
        %vm1770 = vweird.f32 %v1764
        %vm1771 = vmor %vm1769, %vm1770
        %v1772 = vsel %vm1771, %v1764, %v1768
        %v1773 = vand.u32 2147483647, %v1763
        %vm1774 = vcmp.eq.f32.partialorder %v1773, 8.507059e+37
        %v1775 = vand.u32 %v1763, 2147483648
        %v1776 = vor.u32 1.1754944e-38, %v1775
        %v1777 = vsel %vm1774, %v1776, %v1772
        %v1778 = vmul.f32 %v1753, %v1777
        %v1779 = vmin.f32 %v1778, 1.0
        %v1780 = vmax.f32 %v1779, -1.0
        %v1781 = vmul.f32 %v1695, %v1695
        %v1782 = vmin.f32 16.0, %v1781
        %v1783 = vmul.f32 %v1782, 2.1237322e-06
        %v1784 = vadd.f32 %v1783, 0.00028619796
        %v1785 = vmul.f32 %v1782, %v1784
        %v1786 = vadd.f32 %v1785, 0.0036580483
        %v1787 = vmul.f32 %v1782, %v1786
        %v1788 = vadd.f32 %v1787, 0.05243302
        %v1789 = vmul.f32 %v1782, %v1788
        %v1790 = vadd.f32 %v1789, 0.18741608
        %v1791 = vmul.f32 %v1782, %v1790
        %v1792 = vadd.f32 %v1791, 1.1283791
        %v1793 = vmul.f32 %v1695, %v1792
        %v1794 = vmul.f32 %v1782, 3.8918573e-05
        %v1795 = vadd.f32 %v1794, 0.001143296
        %v1796 = vmul.f32 %v1782, %v1795
        %v1797 = vadd.f32 %v1796, 0.014752088
        %v1798 = vmul.f32 %v1782, %v1797
        %v1799 = vadd.f32 %v1798, 0.112945676
        %v1800 = vmul.f32 %v1782, %v1799
        %v1801 = vadd.f32 %v1800, 0.4994258
        %v1802 = vmul.f32 %v1782, %v1801
        %v1803 = vadd.f32 %v1802, 1.0
        %v1804 = vrcp.pop %v1803
        %v1805 = vmul.f32 %v1803, %v1804
        %v1806 = vsub.f32 1.0, %v1805
        %v1807 = vmul.f32 %v1804, %v1806
        %v1808 = vadd.f32 %v1804, %v1807
        %vm1809 = vweird.f32 %v1803
        %vm1810 = vweird.f32 %v1804
        %vm1811 = vmor %vm1809, %vm1810
        %v1812 = vsel %vm1811, %v1804, %v1808
        %v1813 = vand.u32 2147483647, %v1803
        %vm1814 = vcmp.eq.f32.partialorder %v1813, 8.507059e+37
        %v1815 = vand.u32 %v1803, 2147483648
        %v1816 = vor.u32 1.1754944e-38, %v1815
        %v1817 = vsel %vm1814, %v1816, %v1812
        %v1818 = vmul.f32 %v1793, %v1817
        %v1819 = vmin.f32 %v1818, 1.0
        %v1820 = vmax.f32 %v1819, -1.0
        %v1821 = vmul.f32 %v1696, %v1696
        %v1822 = vmin.f32 16.0, %v1821
        %v1823 = vmul.f32 %v1822, 2.1237322e-06
        %v1824 = vadd.f32 %v1823, 0.00028619796
        %v1825 = vmul.f32 %v1822, %v1824
        %v1826 = vadd.f32 %v1825, 0.0036580483
        %v1827 = vmul.f32 %v1822, %v1826
        %v1828 = vadd.f32 %v1827, 0.05243302
        %v1829 = vmul.f32 %v1822, %v1828
        %v1830 = vadd.f32 %v1829, 0.18741608
        %v1831 = vmul.f32 %v1822, %v1830
        %v1832 = vadd.f32 %v1831, 1.1283791
        %v1833 = vmul.f32 %v1696, %v1832
        %v1834 = vmul.f32 %v1822, 3.8918573e-05
        %v1835 = vadd.f32 %v1834, 0.001143296
        %v1836 = vmul.f32 %v1822, %v1835
        %v1837 = vadd.f32 %v1836, 0.014752088
        %v1838 = vmul.f32 %v1822, %v1837
        %v1839 = vadd.f32 %v1838, 0.112945676
        %v1840 = vmul.f32 %v1822, %v1839
        %v1841 = vadd.f32 %v1840, 0.4994258
        %v1842 = vmul.f32 %v1822, %v1841
        %v1843 = vadd.f32 %v1842, 1.0
        %v1844 = vrcp.pop %v1843
        %v1845 = vmul.f32 %v1843, %v1844
        %v1846 = vsub.f32 1.0, %v1845
        %v1847 = vmul.f32 %v1844, %v1846
        %v1848 = vadd.f32 %v1844, %v1847
        %vm1849 = vweird.f32 %v1843
        %vm1850 = vweird.f32 %v1844
        %vm1851 = vmor %vm1849, %vm1850
        %v1852 = vsel %vm1851, %v1844, %v1848
        %v1853 = vand.u32 2147483647, %v1843
        %vm1854 = vcmp.eq.f32.partialorder %v1853, 8.507059e+37
        %v1855 = vand.u32 %v1843, 2147483648
        %v1856 = vor.u32 1.1754944e-38, %v1855
        %v1857 = vsel %vm1854, %v1856, %v1852
        %v1858 = vmul.f32 %v1833, %v1857
        %v1859 = vmin.f32 %v1858, 1.0
        %v1860 = vmax.f32 %v1859, -1.0
        %v1861 = vmul.f32 %v1697, %v1697
        %v1862 = vmin.f32 16.0, %v1861
        %v1863 = vmul.f32 %v1862, 2.1237322e-06
        %v1864 = vadd.f32 %v1863, 0.00028619796
        %v1865 = vmul.f32 %v1862, %v1864
        %v1866 = vadd.f32 %v1865, 0.0036580483
        %v1867 = vmul.f32 %v1862, %v1866
        %v1868 = vadd.f32 %v1867, 0.05243302
        %v1869 = vmul.f32 %v1862, %v1868
        %v1870 = vadd.f32 %v1869, 0.18741608
        %v1871 = vmul.f32 %v1862, %v1870
        %v1872 = vadd.f32 %v1871, 1.1283791
        %v1873 = vmul.f32 %v1697, %v1872
        %v1874 = vmul.f32 %v1862, 3.8918573e-05
        %v1875 = vadd.f32 %v1874, 0.001143296
        %v1876 = vmul.f32 %v1862, %v1875
        %v1877 = vadd.f32 %v1876, 0.014752088
        %v1878 = vmul.f32 %v1862, %v1877
        %v1879 = vadd.f32 %v1878, 0.112945676
        %v1880 = vmul.f32 %v1862, %v1879
        %v1881 = vadd.f32 %v1880, 0.4994258
        %v1882 = vmul.f32 %v1862, %v1881
        %v1883 = vadd.f32 %v1882, 1.0
        %v1884 = vrcp.pop %v1883
        %v1885 = vmul.f32 %v1883, %v1884
        %v1886 = vsub.f32 1.0, %v1885
        %v1887 = vmul.f32 %v1884, %v1886
        %v1888 = vadd.f32 %v1884, %v1887
        %vm1889 = vweird.f32 %v1883
        %vm1890 = vweird.f32 %v1884
        %vm1891 = vmor %vm1889, %vm1890
        %v1892 = vsel %vm1891, %v1884, %v1888
        %v1893 = vand.u32 2147483647, %v1883
        %vm1894 = vcmp.eq.f32.partialorder %v1893, 8.507059e+37
        %v1895 = vand.u32 %v1883, 2147483648
        %v1896 = vor.u32 1.1754944e-38, %v1895
        %v1897 = vsel %vm1894, %v1896, %v1892
        %v1898 = vmul.f32 %v1873, %v1897
        %v1899 = vmin.f32 %v1898, 1.0
        %v1900 = vmax.f32 %v1899, -1.0
        %v1901 = vmul.f32 %v1698, %v1698
        %v1902 = vmin.f32 16.0, %v1901
        %v1903 = vmul.f32 %v1902, 2.1237322e-06
        %v1904 = vadd.f32 %v1903, 0.00028619796
        %v1905 = vmul.f32 %v1902, %v1904
        %v1906 = vadd.f32 %v1905, 0.0036580483
        %v1907 = vmul.f32 %v1902, %v1906
        %v1908 = vadd.f32 %v1907, 0.05243302
        %v1909 = vmul.f32 %v1902, %v1908
        %v1910 = vadd.f32 %v1909, 0.18741608
        %v1911 = vmul.f32 %v1902, %v1910
        %v1912 = vadd.f32 %v1911, 1.1283791
        %v1913 = vmul.f32 %v1698, %v1912
        %v1914 = vmul.f32 %v1902, 3.8918573e-05
        %v1915 = vadd.f32 %v1914, 0.001143296
        %v1916 = vmul.f32 %v1902, %v1915
        %v1917 = vadd.f32 %v1916, 0.014752088
        %v1918 = vmul.f32 %v1902, %v1917
        %v1919 = vadd.f32 %v1918, 0.112945676
        %v1920 = vmul.f32 %v1902, %v1919
        %v1921 = vadd.f32 %v1920, 0.4994258
        %v1922 = vmul.f32 %v1902, %v1921
        %v1923 = vadd.f32 %v1922, 1.0
        %v1924 = vrcp.pop %v1923
        %v1925 = vmul.f32 %v1923, %v1924
        %v1926 = vsub.f32 1.0, %v1925
        %v1927 = vmul.f32 %v1924, %v1926
        %v1928 = vadd.f32 %v1924, %v1927
        %vm1929 = vweird.f32 %v1923
        %vm1930 = vweird.f32 %v1924
        %vm1931 = vmor %vm1929, %vm1930
        %v1932 = vsel %vm1931, %v1924, %v1928
        %v1933 = vand.u32 2147483647, %v1923
        %vm1934 = vcmp.eq.f32.partialorder %v1933, 8.507059e+37
        %v1935 = vand.u32 %v1923, 2147483648
        %v1936 = vor.u32 1.1754944e-38, %v1935
        %v1937 = vsel %vm1934, %v1936, %v1932
        %v1938 = vmul.f32 %v1913, %v1937
        %v1939 = vmin.f32 %v1938, 1.0
        %v1940 = vmax.f32 %v1939, -1.0
        %v1941 = vmul.f32 %v1699, %v1699
        %v1942 = vmin.f32 16.0, %v1941
        %v1943 = vmul.f32 %v1942, 2.1237322e-06
        %v1944 = vadd.f32 %v1943, 0.00028619796
        %v1945 = vmul.f32 %v1942, %v1944
        %v1946 = vadd.f32 %v1945, 0.0036580483
        %v1947 = vmul.f32 %v1942, %v1946
        %v1948 = vadd.f32 %v1947, 0.05243302
        %v1949 = vmul.f32 %v1942, %v1948
        %v1950 = vadd.f32 %v1949, 0.18741608
        %v1951 = vmul.f32 %v1942, %v1950
        %v1952 = vadd.f32 %v1951, 1.1283791
        %v1953 = vmul.f32 %v1699, %v1952
        %v1954 = vmul.f32 %v1942, 3.8918573e-05
        %v1955 = vadd.f32 %v1954, 0.001143296
        %v1956 = vmul.f32 %v1942, %v1955
        %v1957 = vadd.f32 %v1956, 0.014752088
        %v1958 = vmul.f32 %v1942, %v1957
        %v1959 = vadd.f32 %v1958, 0.112945676
        %v1960 = vmul.f32 %v1942, %v1959
        %v1961 = vadd.f32 %v1960, 0.4994258
        %v1962 = vmul.f32 %v1942, %v1961
        %v1963 = vadd.f32 %v1962, 1.0
        %v1964 = vrcp.pop %v1963
        %v1965 = vmul.f32 %v1963, %v1964
        %v1966 = vsub.f32 1.0, %v1965
        %v1967 = vmul.f32 %v1964, %v1966
        %v1968 = vadd.f32 %v1964, %v1967
        %vm1969 = vweird.f32 %v1963
        %vm1970 = vweird.f32 %v1964
        %vm1971 = vmor %vm1969, %vm1970
        %v1972 = vsel %vm1971, %v1964, %v1968
        %v1973 = vand.u32 2147483647, %v1963
        %vm1974 = vcmp.eq.f32.partialorder %v1973, 8.507059e+37
        %v1975 = vand.u32 %v1963, 2147483648
        %v1976 = vor.u32 1.1754944e-38, %v1975
        %v1977 = vsel %vm1974, %v1976, %v1972
        %v1978 = vmul.f32 %v1953, %v1977
        %v1979 = vmin.f32 %v1978, 1.0
        %v1980 = vmax.f32 %v1979, -1.0
        %v1981 = vmul.f32 %v1700, %v1700
        %v1982 = vmin.f32 16.0, %v1981
        %v1983 = vmul.f32 %v1982, 2.1237322e-06
        %v1984 = vadd.f32 %v1983, 0.00028619796
        %v1985 = vmul.f32 %v1982, %v1984
        %v1986 = vadd.f32 %v1985, 0.0036580483
        %v1987 = vmul.f32 %v1982, %v1986
        %v1988 = vadd.f32 %v1987, 0.05243302
        %v1989 = vmul.f32 %v1982, %v1988
        %v1990 = vadd.f32 %v1989, 0.18741608
        %v1991 = vmul.f32 %v1982, %v1990
        %v1992 = vadd.f32 %v1991, 1.1283791
        %v1993 = vmul.f32 %v1700, %v1992
        %v1994 = vmul.f32 %v1982, 3.8918573e-05
        %v1995 = vadd.f32 %v1994, 0.001143296
        %v1996 = vmul.f32 %v1982, %v1995
        %v1997 = vadd.f32 %v1996, 0.014752088
        %v1998 = vmul.f32 %v1982, %v1997
        %v1999 = vadd.f32 %v1998, 0.112945676
        %v2000 = vmul.f32 %v1982, %v1999
        %v2001 = vadd.f32 %v2000, 0.4994258
        %v2002 = vmul.f32 %v1982, %v2001
        %v2003 = vadd.f32 %v2002, 1.0
        %v2004 = vrcp.pop %v2003
        %v2005 = vmul.f32 %v2003, %v2004
        %v2006 = vsub.f32 1.0, %v2005
        %v2007 = vmul.f32 %v2004, %v2006
        %v2008 = vadd.f32 %v2004, %v2007
        %vm2009 = vweird.f32 %v2003
        %vm2010 = vweird.f32 %v2004
        %vm2011 = vmor %vm2009, %vm2010
        %v2012 = vsel %vm2011, %v2004, %v2008
        %v2013 = vand.u32 2147483647, %v2003
        %vm2014 = vcmp.eq.f32.partialorder %v2013, 8.507059e+37
        %v2015 = vand.u32 %v2003, 2147483648
        %v2016 = vor.u32 1.1754944e-38, %v2015
        %v2017 = vsel %vm2014, %v2016, %v2012
        %v2018 = vmul.f32 %v1993, %v2017
        %v2019 = vmin.f32 %v2018, 1.0
        %v2020 = vmax.f32 %v2019, -1.0
        %v2021 = vadd.f32 %v1740, 1.0
        %v2022 = vadd.f32 %v1780, 1.0
        %v2023 = vadd.f32 %v1820, 1.0
        %v2024 = vadd.f32 %v1860, 1.0
        %v2025 = vadd.f32 %v1900, 1.0
        %v2026 = vadd.f32 %v1940, 1.0
        %v2027 = vadd.f32 %v1980, 1.0
        %v2028 = vadd.f32 %v2020, 1.0
        %v2029 = vmul.f32 %v1685, %v2021
        %v2030 = vmul.f32 %v1686, %v2022
        %v2031 = vmul.f32 %v1687, %v2023
        %v2032 = vmul.f32 %v1688, %v2024
        %v2033 = vmul.f32 %v1689, %v2025
        %v2034 = vmul.f32 %v1690, %v2026
        %v2035 = vmul.f32 %v1691, %v2027
        %v2036 = vmul.f32 %v1692, %v2028
        %2037 = vst [vmem:[%s237] sm:$0xff] %v2029
        %2038 = vst [vmem:[%s237 + $0x8] sm:$0xff] %v2030
        %2039 = vst [vmem:[%s237 + $0x10] sm:$0xff] %v2031
        %2040 = vst [vmem:[%s237 + $0x18] sm:$0xff] %v2032
        %2041 = vst [vmem:[%s237 + $0x20] sm:$0xff] %v2033
        %2042 = vst [vmem:[%s237 + $0x28] sm:$0xff] %v2034
        %2043 = vst [vmem:[%s237 + $0x30] sm:$0xff] %v2035
        %2044 = vst [vmem:[%s237 + $0x38] sm:$0xff] %v2036
        %s2045 = sand.u32 %s138, 1
        %s2046 = scalar_lea.sflag [#allocation4], %s2045
        %s2047 = sand.u32 %s138, 1
        %s2048 = smul.addr %s2047, 64
        %s2049 = scalar_lea.vmem [#allocation5], %s2048
        // Predicated region
        $region45: #{tpu_custom_call.1} parent=39 // pred_check
          %p2050 = pneg %p148
        $region46: #{tpu_custom_call.1} parent=39 // pred_check_branch
          %2052 = sbr.rel (%p2050) target = $region48
        $region47: #{tpu_custom_call.1} parent=39 // pred_region
          %s2053 = smul.u32 4, %s20
          %2055 = vsyncadd %s2046, 0
          %s2056 = smul.addr %s2053, 2
          %s2057 = smul.addr %s2056, 8
          %s2058 = scalar_lea.hbm %s5, %s2057
          %s2059 = sshll.u32 %s2049, 4
          %s2060 = int_to_ptr.vmem [resolvable:$true] %s2059
          %s2061 = sshll.u32 %s2058, 4
          %s2062 = int_to_ptr.hbm [resolvable:$true] %s2061
          %2067 = dma.vmem_to_hbm [thread:$0]  %s2060, 1024, %s2062, %s2046, 256, 256, 16
        $region48: #{tpu_custom_call.1} parent=39 // pred_fallthru
          _
      $region40: #{tpu_custom_call.1} parent=5 // pred_fallthru
        _
      %p2068 = scmp.le.s32.totalorder 2, %s15
      // Predicated region
      $region49: #{tpu_custom_call.1} parent=5 // pred_check
        %p2069 = pneg %p2068
      $region50: #{tpu_custom_call.1} parent=5 // pred_check_branch
        %2071 = sbr.rel (%p2069) target = $region52
      $region51: #{tpu_custom_call.1} parent=5 // pred_region
        %s2072 = ssub.s32 %s15, 2
        // Predicated region
        $region53: #{tpu_custom_call.1} parent=51 // pred_check
          %p2073 = pneg %p154
        $region54: #{tpu_custom_call.1} parent=51 // pred_check_branch
          %2075 = sbr.rel (%p2073) target = $region56
        $region55: #{tpu_custom_call.1} parent=51 // pred_region
          %s2076 = sand.u32 %s139, 1
          %s2077 = scalar_lea.sflag [#allocation4], %s2076
          %s2078 = sand.u32 %s139, 1
          %s2079 = smul.addr %s2078, 64
          %s2080 = scalar_lea.vmem [#allocation5], %s2079
          %2082 = dma.done %s2077, 1024
        $region56: #{tpu_custom_call.1} parent=51 // pred_fallthru
          _
      $region52: #{tpu_custom_call.1} parent=5 // pred_fallthru
        _
    $region6: #{tpu_custom_call.1} parent=1 // loop_footer
      %s19 = sadd.s32 1, %s15
    $region7: #{tpu_custom_call.1} parent=1 // loop_footer_branch
      %14 = sbr.rel target = $region3
    $region8: #{tpu_custom_call.1} parent=1 // loop_exit
      _
    %2083 = vsyncpa [#allocation3], 1
    %s2084 = scalar_lea.sflag [#allocation3], 1
    %2085 = vsyncpa %s2084, 1
    %2086 = vsyncpa [#allocation4], 1
    %s2087 = scalar_lea.sflag [#allocation4], 1
    %2088 = vsyncpa %s2087, 1

</llo_original>
